<compile_context>
chip_gen: v7x
topology: tpu7x:2x2x1
jax: 0.10.0
libtpu: 0.0.40
codegen_flags: <defaults>
</compile_context>

<pallas_src>
import jax
import jax.numpy as jnp
from jax.experimental import pallas as pl
from jax.experimental.pallas import tpu as pltpu

PAD = 64  # max(fan_in, fan_out) over all layers -> common padded tile width


def _layer_dims(neurons_in, neurons_out):
    # (fan_in, fan_out) of every Linear, in kernel execution order:
    #   per ResNet block: identity, linear1, linear2 ; then the final Linear.
    return [
        (neurons_in, 16), (neurons_in, 16), (16, 16),   # ResNetBlock(nin, 16)
        (16, 32), (16, 32), (32, 32),                   # ResNetBlock(16, 32)
        (32, 64), (32, 64), (64, 64),                   # ResNetBlock(32, 64)
        (64, 32), (64, 32), (32, 32),                   # ResNetBlock(64, 32)
        (32, neurons_out),                              # Linear(32, nout)
    ]


def _mish(v):
    # mish(x) = x * tanh(softplus(x)); mish(0) == 0 so zero padding is preserved.
    return v * jnp.tanh(jnp.logaddexp(v, 0.0))


def mlp_kernel(x_ref, w_ref, b_ref, o_ref):
    """x_ref: (1, PAD); w_ref: (13, PAD, PAD); b_ref: (13, 1, PAD); o_ref: (1, PAD)."""

    def linear(h, i):
        # Weights are zero-padded outside their valid (fan_in, fan_out) block,
        # so padded lanes stay exactly zero through the whole network.
        return jnp.dot(h, w_ref[i], preferred_element_type=jnp.float32) + b_ref[i]

    h = x_ref[...]
    layer = 0
    for _ in range(4):                       # 4 ResNet blocks
        ident = linear(h, layer)             # identity projection (nin != nout)
        r = _mish(h)
        r = linear(r, layer + 1)
        r = _mish(r)
        r = linear(r, layer + 2)
        h = ident + r
        layer += 3
    h = linear(h, layer)                     # final Linear(32, neurons_out)

    # Numerically-stable sigmoid: exp(-|x|) on the EUP + approx reciprocal (EUP),
    # no inf intermediates for large |x|.
    z = jnp.exp(-jnp.abs(h))
    s = pl.reciprocal(1.0 + z, approx=True)
    o_ref[...] = jnp.where(h >= 0.0, s, 1.0 - s)


def _init_linear(key, fan_in, fan_out):
    # PyTorch-style uniform(-1/sqrt(fan_in), 1/sqrt(fan_in)) init.
    kw, kb = jax.random.split(key)
    bound = 1.0 / float(fan_in) ** 0.5
    w = jax.random.uniform(kw, (fan_in, fan_out), jnp.float32, -bound, bound)
    b = jax.random.uniform(kb, (fan_out,), jnp.float32, -bound, bound)
    return w, b


def init_packed_params(key, neurons_in, neurons_out):
    """Pack all 13 Linear layers into one weight slab and one bias slab."""
    w_list, b_list = [], []
    for fan_in, fan_out in _layer_dims(neurons_in, neurons_out):
        key, k = jax.random.split(key)
        w, b = _init_linear(k, fan_in, fan_out)
        w_list.append(jnp.zeros((PAD, PAD), jnp.float32).at[:fan_in, :fan_out].set(w))
        b_list.append(jnp.zeros((1, PAD), jnp.float32).at[0, :fan_out].set(b))
    return jnp.stack(w_list), jnp.stack(b_list)       # (13, PAD, PAD), (13, 1, PAD)


def nn_forward(x, w_slab, b_slab, neurons_out):
    """Equivalent of `nn.forward`: returns network(x)[0], shape (neurons_out,)."""
    neurons_in = x.shape[-1]
    n_layers = w_slab.shape[0]

    # Only row 0 of the batch is consumed by the PyTorch forward -> compute only it.
    x0 = jnp.zeros((1, PAD), jnp.float32).at[0, :neurons_in].set(
        x[0].astype(jnp.float32))

    vmem = pl.BlockSpec(memory_space=pltpu.MemorySpace.VMEM)
    cost = pl.CostEstimate(
        flops=2 * n_layers * PAD * PAD,                 # 13 tiny (1,64)@(64,64) dots
        transcendentals=(2 * 4 * 3 + 1) * PAD,          # mish (exp/log/tanh) + sigmoid
        bytes_accessed=4 * (x0.size + w_slab.size + b_slab.size + PAD),
    )
    out = pl.pallas_call(
        mlp_kernel,
        out_shape=jax.ShapeDtypeStruct((1, PAD), jnp.float32),
        in_specs=[vmem, vmem, vmem],
        out_specs=vmem,
        cost_estimate=cost,
    )(x0, w_slab, b_slab)
    return out[0, :neurons_out]


if __name__ == "__main__":
    neurons_in, neurons_out, batch = 8, 4, 2
    key = jax.random.PRNGKey(0)
    key, kx, kp = jax.random.split(key, 3)

    x = jax.random.normal(kx, (batch, neurons_in), jnp.float32)
    w_slab, b_slab = init_packed_params(kp, neurons_in, neurons_out)

    y = nn_forward(x, w_slab, b_slab, neurons_out)
    jax.block_until_ready(y)
    assert y.shape == (neurons_out,)
    print("KERNEL_OK")
</pallas_src>

<mosaic_0001>
module attributes {stable_mosaic.version = 11 : i64} {
  func.func @mlp_kernel(%arg0: memref<1x64xf32, #tpu.memory_space<vmem>>, %arg1: memref<13x64x64xf32, #tpu.memory_space<vmem>>, %arg2: memref<13x1x64xf32, #tpu.memory_space<vmem>>, %arg3: memref<1x64xf32, #tpu.memory_space<vmem>>) attributes {dimension_semantics = [], scalar_prefetch = 0 : i64, scratch_operands = 0 : i64, tpu.core_type = #tpu.core_type<tc>} {
    %c0 = arith.constant 0 : index
    %c0_0 = arith.constant 0 : index
    %0 = vector.load %arg0[%c0, %c0_0] : memref<1x64xf32, #tpu.memory_space<vmem>>, vector<1x64xf32>
    %c0_1 = arith.constant 0 : index
    %c0_2 = arith.constant 0 : index
    %c0_3 = arith.constant 0 : index
    %1 = vector.load %arg1[%c0_1, %c0_2, %c0_3] : memref<13x64x64xf32, #tpu.memory_space<vmem>>, vector<1x64x64xf32>
    %2 = vector.shape_cast %1 : vector<1x64x64xf32> to vector<64x64xf32>
    %cst = arith.constant dense<0.000000e+00> : vector<1x64xf32>
    %3 = tpu.matmul %0, %2, %cst {dimension_numbers = #tpu.dot_dimension_numbers<[1], [0], [0], [1], [0, 0, 1, 1], [], []>} : vector<1x64xf32>, vector<64x64xf32>, vector<1x64xf32> -> vector<1x64xf32>
    %c0_4 = arith.constant 0 : index
    %c0_5 = arith.constant 0 : index
    %c0_6 = arith.constant 0 : index
    %4 = vector.load %arg2[%c0_4, %c0_5, %c0_6] : memref<13x1x64xf32, #tpu.memory_space<vmem>>, vector<1x1x64xf32>
    %5 = vector.shape_cast %4 : vector<1x1x64xf32> to vector<1x64xf32>
    %6 = arith.addf %3, %5 : vector<1x64xf32>
    %cst_7 = arith.constant 0.000000e+00 : f32
    %7 = vector.broadcast %cst_7 : f32 to vector<1x64xf32>
    %8 = arith.maximumf %0, %7 : vector<1x64xf32>
    %9 = vector.broadcast %cst_7 : f32 to vector<1x64xf32>
    %10 = arith.subf %0, %9 : vector<1x64xf32>
    %11 = arith.cmpf one, %10, %10 : vector<1x64xf32>
    %12 = vector.broadcast %cst_7 : f32 to vector<1x64xf32>
    %13 = arith.addf %0, %12 : vector<1x64xf32>
    %14 = math.absf %10 : vector<1x64xf32>
    %cst_8 = arith.constant 0.000000e+00 : f32
    %15 = vector.broadcast %cst_8 : f32 to vector<1x64xf32>
    %16 = arith.subf %15, %14 : vector<1x64xf32>
    %17 = math.exp %16 : vector<1x64xf32>
    %18 = math.log1p %17 : vector<1x64xf32>
    %19 = arith.addf %8, %18 : vector<1x64xf32>
    %20 = arith.select %11, %13, %19 : vector<1x64xi1>, vector<1x64xf32>
    %21 = math.tanh %20 : vector<1x64xf32>
    %22 = arith.mulf %0, %21 : vector<1x64xf32>
    %c1 = arith.constant 1 : index
    %c0_9 = arith.constant 0 : index
    %c0_10 = arith.constant 0 : index
    %23 = vector.load %arg1[%c1, %c0_9, %c0_10] : memref<13x64x64xf32, #tpu.memory_space<vmem>>, vector<1x64x64xf32>
    %24 = vector.shape_cast %23 : vector<1x64x64xf32> to vector<64x64xf32>
    %cst_11 = arith.constant dense<0.000000e+00> : vector<1x64xf32>
    %25 = tpu.matmul %22, %24, %cst_11 {dimension_numbers = #tpu.dot_dimension_numbers<[1], [0], [0], [1], [0, 0, 1, 1], [], []>} : vector<1x64xf32>, vector<64x64xf32>, vector<1x64xf32> -> vector<1x64xf32>
    %c1_12 = arith.constant 1 : index
    %c0_13 = arith.constant 0 : index
    %c0_14 = arith.constant 0 : index
    %26 = vector.load %arg2[%c1_12, %c0_13, %c0_14] : memref<13x1x64xf32, #tpu.memory_space<vmem>>, vector<1x1x64xf32>
    %27 = vector.shape_cast %26 : vector<1x1x64xf32> to vector<1x64xf32>
    %28 = arith.addf %25, %27 : vector<1x64xf32>
    %cst_15 = arith.constant 0.000000e+00 : f32
    %29 = vector.broadcast %cst_15 : f32 to vector<1x64xf32>
    %30 = arith.maximumf %28, %29 : vector<1x64xf32>
    %31 = vector.broadcast %cst_15 : f32 to vector<1x64xf32>
    %32 = arith.subf %28, %31 : vector<1x64xf32>
    %33 = arith.cmpf one, %32, %32 : vector<1x64xf32>
    %34 = vector.broadcast %cst_15 : f32 to vector<1x64xf32>
    %35 = arith.addf %28, %34 : vector<1x64xf32>
    %36 = math.absf %32 : vector<1x64xf32>
    %cst_16 = arith.constant 0.000000e+00 : f32
    %37 = vector.broadcast %cst_16 : f32 to vector<1x64xf32>
    %38 = arith.subf %37, %36 : vector<1x64xf32>
    %39 = math.exp %38 : vector<1x64xf32>
    %40 = math.log1p %39 : vector<1x64xf32>
    %41 = arith.addf %30, %40 : vector<1x64xf32>
    %42 = arith.select %33, %35, %41 : vector<1x64xi1>, vector<1x64xf32>
    %43 = math.tanh %42 : vector<1x64xf32>
    %44 = arith.mulf %28, %43 : vector<1x64xf32>
    %c2 = arith.constant 2 : index
    %c0_17 = arith.constant 0 : index
    %c0_18 = arith.constant 0 : index
    %45 = vector.load %arg1[%c2, %c0_17, %c0_18] : memref<13x64x64xf32, #tpu.memory_space<vmem>>, vector<1x64x64xf32>
    %46 = vector.shape_cast %45 : vector<1x64x64xf32> to vector<64x64xf32>
    %cst_19 = arith.constant dense<0.000000e+00> : vector<1x64xf32>
    %47 = tpu.matmul %44, %46, %cst_19 {dimension_numbers = #tpu.dot_dimension_numbers<[1], [0], [0], [1], [0, 0, 1, 1], [], []>} : vector<1x64xf32>, vector<64x64xf32>, vector<1x64xf32> -> vector<1x64xf32>
    %c2_20 = arith.constant 2 : index
    %c0_21 = arith.constant 0 : index
    %c0_22 = arith.constant 0 : index
    %48 = vector.load %arg2[%c2_20, %c0_21, %c0_22] : memref<13x1x64xf32, #tpu.memory_space<vmem>>, vector<1x1x64xf32>
    %49 = vector.shape_cast %48 : vector<1x1x64xf32> to vector<1x64xf32>
    %50 = arith.addf %47, %49 : vector<1x64xf32>
    %51 = arith.addf %6, %50 : vector<1x64xf32>
    %c3 = arith.constant 3 : index
    %c0_23 = arith.constant 0 : index
    %c0_24 = arith.constant 0 : index
    %52 = vector.load %arg1[%c3, %c0_23, %c0_24] : memref<13x64x64xf32, #tpu.memory_space<vmem>>, vector<1x64x64xf32>
    %53 = vector.shape_cast %52 : vector<1x64x64xf32> to vector<64x64xf32>
    %cst_25 = arith.constant dense<0.000000e+00> : vector<1x64xf32>
    %54 = tpu.matmul %51, %53, %cst_25 {dimension_numbers = #tpu.dot_dimension_numbers<[1], [0], [0], [1], [0, 0, 1, 1], [], []>} : vector<1x64xf32>, vector<64x64xf32>, vector<1x64xf32> -> vector<1x64xf32>
    %c3_26 = arith.constant 3 : index
    %c0_27 = arith.constant 0 : index
    %c0_28 = arith.constant 0 : index
    %55 = vector.load %arg2[%c3_26, %c0_27, %c0_28] : memref<13x1x64xf32, #tpu.memory_space<vmem>>, vector<1x1x64xf32>
    %56 = vector.shape_cast %55 : vector<1x1x64xf32> to vector<1x64xf32>
    %57 = arith.addf %54, %56 : vector<1x64xf32>
    %cst_29 = arith.constant 0.000000e+00 : f32
    %58 = vector.broadcast %cst_29 : f32 to vector<1x64xf32>
    %59 = arith.maximumf %51, %58 : vector<1x64xf32>
    %60 = vector.broadcast %cst_29 : f32 to vector<1x64xf32>
    %61 = arith.subf %51, %60 : vector<1x64xf32>
    %62 = arith.cmpf one, %61, %61 : vector<1x64xf32>
    %63 = vector.broadcast %cst_29 : f32 to vector<1x64xf32>
    %64 = arith.addf %51, %63 : vector<1x64xf32>
    %65 = math.absf %61 : vector<1x64xf32>
    %cst_30 = arith.constant 0.000000e+00 : f32
    %66 = vector.broadcast %cst_30 : f32 to vector<1x64xf32>
    %67 = arith.subf %66, %65 : vector<1x64xf32>
    %68 = math.exp %67 : vector<1x64xf32>
    %69 = math.log1p %68 : vector<1x64xf32>
    %70 = arith.addf %59, %69 : vector<1x64xf32>
    %71 = arith.select %62, %64, %70 : vector<1x64xi1>, vector<1x64xf32>
    %72 = math.tanh %71 : vector<1x64xf32>
    %73 = arith.mulf %51, %72 : vector<1x64xf32>
    %c4 = arith.constant 4 : index
    %c0_31 = arith.constant 0 : index
    %c0_32 = arith.constant 0 : index
    %74 = vector.load %arg1[%c4, %c0_31, %c0_32] : memref<13x64x64xf32, #tpu.memory_space<vmem>>, vector<1x64x64xf32>
    %75 = vector.shape_cast %74 : vector<1x64x64xf32> to vector<64x64xf32>
    %cst_33 = arith.constant dense<0.000000e+00> : vector<1x64xf32>
    %76 = tpu.matmul %73, %75, %cst_33 {dimension_numbers = #tpu.dot_dimension_numbers<[1], [0], [0], [1], [0, 0, 1, 1], [], []>} : vector<1x64xf32>, vector<64x64xf32>, vector<1x64xf32> -> vector<1x64xf32>
    %c4_34 = arith.constant 4 : index
    %c0_35 = arith.constant 0 : index
    %c0_36 = arith.constant 0 : index
    %77 = vector.load %arg2[%c4_34, %c0_35, %c0_36] : memref<13x1x64xf32, #tpu.memory_space<vmem>>, vector<1x1x64xf32>
    %78 = vector.shape_cast %77 : vector<1x1x64xf32> to vector<1x64xf32>
    %79 = arith.addf %76, %78 : vector<1x64xf32>
    %cst_37 = arith.constant 0.000000e+00 : f32
    %80 = vector.broadcast %cst_37 : f32 to vector<1x64xf32>
    %81 = arith.maximumf %79, %80 : vector<1x64xf32>
    %82 = vector.broadcast %cst_37 : f32 to vector<1x64xf32>
    %83 = arith.subf %79, %82 : vector<1x64xf32>
    %84 = arith.cmpf one, %83, %83 : vector<1x64xf32>
    %85 = vector.broadcast %cst_37 : f32 to vector<1x64xf32>
    %86 = arith.addf %79, %85 : vector<1x64xf32>
    %87 = math.absf %83 : vector<1x64xf32>
    %cst_38 = arith.constant 0.000000e+00 : f32
    %88 = vector.broadcast %cst_38 : f32 to vector<1x64xf32>
    %89 = arith.subf %88, %87 : vector<1x64xf32>
    %90 = math.exp %89 : vector<1x64xf32>
    %91 = math.log1p %90 : vector<1x64xf32>
    %92 = arith.addf %81, %91 : vector<1x64xf32>
    %93 = arith.select %84, %86, %92 : vector<1x64xi1>, vector<1x64xf32>
    %94 = math.tanh %93 : vector<1x64xf32>
    %95 = arith.mulf %79, %94 : vector<1x64xf32>
    %c5 = arith.constant 5 : index
    %c0_39 = arith.constant 0 : index
    %c0_40 = arith.constant 0 : index
    %96 = vector.load %arg1[%c5, %c0_39, %c0_40] : memref<13x64x64xf32, #tpu.memory_space<vmem>>, vector<1x64x64xf32>
    %97 = vector.shape_cast %96 : vector<1x64x64xf32> to vector<64x64xf32>
    %cst_41 = arith.constant dense<0.000000e+00> : vector<1x64xf32>
    %98 = tpu.matmul %95, %97, %cst_41 {dimension_numbers = #tpu.dot_dimension_numbers<[1], [0], [0], [1], [0, 0, 1, 1], [], []>} : vector<1x64xf32>, vector<64x64xf32>, vector<1x64xf32> -> vector<1x64xf32>
    %c5_42 = arith.constant 5 : index
    %c0_43 = arith.constant 0 : index
    %c0_44 = arith.constant 0 : index
    %99 = vector.load %arg2[%c5_42, %c0_43, %c0_44] : memref<13x1x64xf32, #tpu.memory_space<vmem>>, vector<1x1x64xf32>
    %100 = vector.shape_cast %99 : vector<1x1x64xf32> to vector<1x64xf32>
    %101 = arith.addf %98, %100 : vector<1x64xf32>
    %102 = arith.addf %57, %101 : vector<1x64xf32>
    %c6 = arith.constant 6 : index
    %c0_45 = arith.constant 0 : index
    %c0_46 = arith.constant 0 : index
    %103 = vector.load %arg1[%c6, %c0_45, %c0_46] : memref<13x64x64xf32, #tpu.memory_space<vmem>>, vector<1x64x64xf32>
    %104 = vector.shape_cast %103 : vector<1x64x64xf32> to vector<64x64xf32>
    %cst_47 = arith.constant dense<0.000000e+00> : vector<1x64xf32>
    %105 = tpu.matmul %102, %104, %cst_47 {dimension_numbers = #tpu.dot_dimension_numbers<[1], [0], [0], [1], [0, 0, 1, 1], [], []>} : vector<1x64xf32>, vector<64x64xf32>, vector<1x64xf32> -> vector<1x64xf32>
    %c6_48 = arith.constant 6 : index
    %c0_49 = arith.constant 0 : index
    %c0_50 = arith.constant 0 : index
    %106 = vector.load %arg2[%c6_48, %c0_49, %c0_50] : memref<13x1x64xf32, #tpu.memory_space<vmem>>, vector<1x1x64xf32>
    %107 = vector.shape_cast %106 : vector<1x1x64xf32> to vector<1x64xf32>
    %108 = arith.addf %105, %107 : vector<1x64xf32>
    %cst_51 = arith.constant 0.000000e+00 : f32
    %109 = vector.broadcast %cst_51 : f32 to vector<1x64xf32>
    %110 = arith.maximumf %102, %109 : vector<1x64xf32>
    %111 = vector.broadcast %cst_51 : f32 to vector<1x64xf32>
    %112 = arith.subf %102, %111 : vector<1x64xf32>
    %113 = arith.cmpf one, %112, %112 : vector<1x64xf32>
    %114 = vector.broadcast %cst_51 : f32 to vector<1x64xf32>
    %115 = arith.addf %102, %114 : vector<1x64xf32>
    %116 = math.absf %112 : vector<1x64xf32>
    %cst_52 = arith.constant 0.000000e+00 : f32
    %117 = vector.broadcast %cst_52 : f32 to vector<1x64xf32>
    %118 = arith.subf %117, %116 : vector<1x64xf32>
    %119 = math.exp %118 : vector<1x64xf32>
    %120 = math.log1p %119 : vector<1x64xf32>
    %121 = arith.addf %110, %120 : vector<1x64xf32>
    %122 = arith.select %113, %115, %121 : vector<1x64xi1>, vector<1x64xf32>
    %123 = math.tanh %122 : vector<1x64xf32>
    %124 = arith.mulf %102, %123 : vector<1x64xf32>
    %c7 = arith.constant 7 : index
    %c0_53 = arith.constant 0 : index
    %c0_54 = arith.constant 0 : index
    %125 = vector.load %arg1[%c7, %c0_53, %c0_54] : memref<13x64x64xf32, #tpu.memory_space<vmem>>, vector<1x64x64xf32>
    %126 = vector.shape_cast %125 : vector<1x64x64xf32> to vector<64x64xf32>
    %cst_55 = arith.constant dense<0.000000e+00> : vector<1x64xf32>
    %127 = tpu.matmul %124, %126, %cst_55 {dimension_numbers = #tpu.dot_dimension_numbers<[1], [0], [0], [1], [0, 0, 1, 1], [], []>} : vector<1x64xf32>, vector<64x64xf32>, vector<1x64xf32> -> vector<1x64xf32>
    %c7_56 = arith.constant 7 : index
    %c0_57 = arith.constant 0 : index
    %c0_58 = arith.constant 0 : index
    %128 = vector.load %arg2[%c7_56, %c0_57, %c0_58] : memref<13x1x64xf32, #tpu.memory_space<vmem>>, vector<1x1x64xf32>
    %129 = vector.shape_cast %128 : vector<1x1x64xf32> to vector<1x64xf32>
    %130 = arith.addf %127, %129 : vector<1x64xf32>
    %cst_59 = arith.constant 0.000000e+00 : f32
    %131 = vector.broadcast %cst_59 : f32 to vector<1x64xf32>
    %132 = arith.maximumf %130, %131 : vector<1x64xf32>
    %133 = vector.broadcast %cst_59 : f32 to vector<1x64xf32>
    %134 = arith.subf %130, %133 : vector<1x64xf32>
    %135 = arith.cmpf one, %134, %134 : vector<1x64xf32>
    %136 = vector.broadcast %cst_59 : f32 to vector<1x64xf32>
    %137 = arith.addf %130, %136 : vector<1x64xf32>
    %138 = math.absf %134 : vector<1x64xf32>
    %cst_60 = arith.constant 0.000000e+00 : f32
    %139 = vector.broadcast %cst_60 : f32 to vector<1x64xf32>
    %140 = arith.subf %139, %138 : vector<1x64xf32>
    %141 = math.exp %140 : vector<1x64xf32>
    %142 = math.log1p %141 : vector<1x64xf32>
    %143 = arith.addf %132, %142 : vector<1x64xf32>
    %144 = arith.select %135, %137, %143 : vector<1x64xi1>, vector<1x64xf32>
    %145 = math.tanh %144 : vector<1x64xf32>
    %146 = arith.mulf %130, %145 : vector<1x64xf32>
    %c8 = arith.constant 8 : index
    %c0_61 = arith.constant 0 : index
    %c0_62 = arith.constant 0 : index
    %147 = vector.load %arg1[%c8, %c0_61, %c0_62] : memref<13x64x64xf32, #tpu.memory_space<vmem>>, vector<1x64x64xf32>
    %148 = vector.shape_cast %147 : vector<1x64x64xf32> to vector<64x64xf32>
    %cst_63 = arith.constant dense<0.000000e+00> : vector<1x64xf32>
    %149 = tpu.matmul %146, %148, %cst_63 {dimension_numbers = #tpu.dot_dimension_numbers<[1], [0], [0], [1], [0, 0, 1, 1], [], []>} : vector<1x64xf32>, vector<64x64xf32>, vector<1x64xf32> -> vector<1x64xf32>
    %c8_64 = arith.constant 8 : index
    %c0_65 = arith.constant 0 : index
    %c0_66 = arith.constant 0 : index
    %150 = vector.load %arg2[%c8_64, %c0_65, %c0_66] : memref<13x1x64xf32, #tpu.memory_space<vmem>>, vector<1x1x64xf32>
    %151 = vector.shape_cast %150 : vector<1x1x64xf32> to vector<1x64xf32>
    %152 = arith.addf %149, %151 : vector<1x64xf32>
    %153 = arith.addf %108, %152 : vector<1x64xf32>
    %c9 = arith.constant 9 : index
    %c0_67 = arith.constant 0 : index
    %c0_68 = arith.constant 0 : index
    %154 = vector.load %arg1[%c9, %c0_67, %c0_68] : memref<13x64x64xf32, #tpu.memory_space<vmem>>, vector<1x64x64xf32>
    %155 = vector.shape_cast %154 : vector<1x64x64xf32> to vector<64x64xf32>
    %cst_69 = arith.constant dense<0.000000e+00> : vector<1x64xf32>
    %156 = tpu.matmul %153, %155, %cst_69 {dimension_numbers = #tpu.dot_dimension_numbers<[1], [0], [0], [1], [0, 0, 1, 1], [], []>} : vector<1x64xf32>, vector<64x64xf32>, vector<1x64xf32> -> vector<1x64xf32>
    %c9_70 = arith.constant 9 : index
    %c0_71 = arith.constant 0 : index
    %c0_72 = arith.constant 0 : index
    %157 = vector.load %arg2[%c9_70, %c0_71, %c0_72] : memref<13x1x64xf32, #tpu.memory_space<vmem>>, vector<1x1x64xf32>
    %158 = vector.shape_cast %157 : vector<1x1x64xf32> to vector<1x64xf32>
    %159 = arith.addf %156, %158 : vector<1x64xf32>
    %cst_73 = arith.constant 0.000000e+00 : f32
    %160 = vector.broadcast %cst_73 : f32 to vector<1x64xf32>
    %161 = arith.maximumf %153, %160 : vector<1x64xf32>
    %162 = vector.broadcast %cst_73 : f32 to vector<1x64xf32>
    %163 = arith.subf %153, %162 : vector<1x64xf32>
    %164 = arith.cmpf one, %163, %163 : vector<1x64xf32>
    %165 = vector.broadcast %cst_73 : f32 to vector<1x64xf32>
    %166 = arith.addf %153, %165 : vector<1x64xf32>
    %167 = math.absf %163 : vector<1x64xf32>
    %cst_74 = arith.constant 0.000000e+00 : f32
    %168 = vector.broadcast %cst_74 : f32 to vector<1x64xf32>
    %169 = arith.subf %168, %167 : vector<1x64xf32>
    %170 = math.exp %169 : vector<1x64xf32>
    %171 = math.log1p %170 : vector<1x64xf32>
    %172 = arith.addf %161, %171 : vector<1x64xf32>
    %173 = arith.select %164, %166, %172 : vector<1x64xi1>, vector<1x64xf32>
    %174 = math.tanh %173 : vector<1x64xf32>
    %175 = arith.mulf %153, %174 : vector<1x64xf32>
    %c10 = arith.constant 10 : index
    %c0_75 = arith.constant 0 : index
    %c0_76 = arith.constant 0 : index
    %176 = vector.load %arg1[%c10, %c0_75, %c0_76] : memref<13x64x64xf32, #tpu.memory_space<vmem>>, vector<1x64x64xf32>
    %177 = vector.shape_cast %176 : vector<1x64x64xf32> to vector<64x64xf32>
    %cst_77 = arith.constant dense<0.000000e+00> : vector<1x64xf32>
    %178 = tpu.matmul %175, %177, %cst_77 {dimension_numbers = #tpu.dot_dimension_numbers<[1], [0], [0], [1], [0, 0, 1, 1], [], []>} : vector<1x64xf32>, vector<64x64xf32>, vector<1x64xf32> -> vector<1x64xf32>
    %c10_78 = arith.constant 10 : index
    %c0_79 = arith.constant 0 : index
    %c0_80 = arith.constant 0 : index
    %179 = vector.load %arg2[%c10_78, %c0_79, %c0_80] : memref<13x1x64xf32, #tpu.memory_space<vmem>>, vector<1x1x64xf32>
    %180 = vector.shape_cast %179 : vector<1x1x64xf32> to vector<1x64xf32>
    %181 = arith.addf %178, %180 : vector<1x64xf32>
    %cst_81 = arith.constant 0.000000e+00 : f32
    %182 = vector.broadcast %cst_81 : f32 to vector<1x64xf32>
    %183 = arith.maximumf %181, %182 : vector<1x64xf32>
    %184 = vector.broadcast %cst_81 : f32 to vector<1x64xf32>
    %185 = arith.subf %181, %184 : vector<1x64xf32>
    %186 = arith.cmpf one, %185, %185 : vector<1x64xf32>
    %187 = vector.broadcast %cst_81 : f32 to vector<1x64xf32>
    %188 = arith.addf %181, %187 : vector<1x64xf32>
    %189 = math.absf %185 : vector<1x64xf32>
    %cst_82 = arith.constant 0.000000e+00 : f32
    %190 = vector.broadcast %cst_82 : f32 to vector<1x64xf32>
    %191 = arith.subf %190, %189 : vector<1x64xf32>
    %192 = math.exp %191 : vector<1x64xf32>
    %193 = math.log1p %192 : vector<1x64xf32>
    %194 = arith.addf %183, %193 : vector<1x64xf32>
    %195 = arith.select %186, %188, %194 : vector<1x64xi1>, vector<1x64xf32>
    %196 = math.tanh %195 : vector<1x64xf32>
    %197 = arith.mulf %181, %196 : vector<1x64xf32>
    %c11 = arith.constant 11 : index
    %c0_83 = arith.constant 0 : index
    %c0_84 = arith.constant 0 : index
    %198 = vector.load %arg1[%c11, %c0_83, %c0_84] : memref<13x64x64xf32, #tpu.memory_space<vmem>>, vector<1x64x64xf32>
    %199 = vector.shape_cast %198 : vector<1x64x64xf32> to vector<64x64xf32>
    %cst_85 = arith.constant dense<0.000000e+00> : vector<1x64xf32>
    %200 = tpu.matmul %197, %199, %cst_85 {dimension_numbers = #tpu.dot_dimension_numbers<[1], [0], [0], [1], [0, 0, 1, 1], [], []>} : vector<1x64xf32>, vector<64x64xf32>, vector<1x64xf32> -> vector<1x64xf32>
    %c11_86 = arith.constant 11 : index
    %c0_87 = arith.constant 0 : index
    %c0_88 = arith.constant 0 : index
    %201 = vector.load %arg2[%c11_86, %c0_87, %c0_88] : memref<13x1x64xf32, #tpu.memory_space<vmem>>, vector<1x1x64xf32>
    %202 = vector.shape_cast %201 : vector<1x1x64xf32> to vector<1x64xf32>
    %203 = arith.addf %200, %202 : vector<1x64xf32>
    %204 = arith.addf %159, %203 : vector<1x64xf32>
    %c12 = arith.constant 12 : index
    %c0_89 = arith.constant 0 : index
    %c0_90 = arith.constant 0 : index
    %205 = vector.load %arg1[%c12, %c0_89, %c0_90] : memref<13x64x64xf32, #tpu.memory_space<vmem>>, vector<1x64x64xf32>
    %206 = vector.shape_cast %205 : vector<1x64x64xf32> to vector<64x64xf32>
    %cst_91 = arith.constant dense<0.000000e+00> : vector<1x64xf32>
    %207 = tpu.matmul %204, %206, %cst_91 {dimension_numbers = #tpu.dot_dimension_numbers<[1], [0], [0], [1], [0, 0, 1, 1], [], []>} : vector<1x64xf32>, vector<64x64xf32>, vector<1x64xf32> -> vector<1x64xf32>
    %c12_92 = arith.constant 12 : index
    %c0_93 = arith.constant 0 : index
    %c0_94 = arith.constant 0 : index
    %208 = vector.load %arg2[%c12_92, %c0_93, %c0_94] : memref<13x1x64xf32, #tpu.memory_space<vmem>>, vector<1x1x64xf32>
    %209 = vector.shape_cast %208 : vector<1x1x64xf32> to vector<1x64xf32>
    %210 = arith.addf %207, %209 : vector<1x64xf32>
    %211 = math.absf %210 : vector<1x64xf32>
    %cst_95 = arith.constant 0.000000e+00 : f32
    %212 = vector.broadcast %cst_95 : f32 to vector<1x64xf32>
    %213 = arith.subf %212, %211 : vector<1x64xf32>
    %214 = math.exp %213 : vector<1x64xf32>
    %cst_96 = arith.constant 1.000000e+00 : f32
    %215 = vector.broadcast %cst_96 : f32 to vector<1x64xf32>
    %216 = arith.addf %215, %214 : vector<1x64xf32>
    %217 = tpu.reciprocal %216 {approx = true} : vector<1x64xf32> -> vector<1x64xf32>
    %cst_97 = arith.constant 0.000000e+00 : f32
    %218 = vector.broadcast %cst_97 : f32 to vector<1x64xf32>
    %219 = arith.cmpf oge, %210, %218 : vector<1x64xf32>
    %cst_98 = arith.constant 1.000000e+00 : f32
    %220 = vector.broadcast %cst_98 : f32 to vector<1x64xf32>
    %221 = arith.subf %220, %217 : vector<1x64xf32>
    %222 = arith.select %219, %217, %221 : vector<1x64xi1>, vector<1x64xf32>
    %c0_99 = arith.constant 0 : index
    %c0_100 = arith.constant 0 : index
    %223 = vector.load %arg3[%c0_99, %c0_100] : memref<1x64xf32, #tpu.memory_space<vmem>>, vector<1x64xf32>
    tpu.vector_store %arg3[%c0_99, %c0_100], %222 {strides = array<i32>} : memref<1x64xf32, #tpu.memory_space<vmem>>, vector<1x64xf32>,
    return
  }
}

</mosaic_0001>

<llo_original>
// kernel: tpu_custom_call.1
$region0: #{tpu_custom_call.1}
  #allocation0 [shape = 'u32[]', space=smem, size = 0x4, offset = 0x4, fixed_abs, tag = 'smem constant byte address 0x4 - core index']
  #allocation1 [shape = 'u32[144,128]{1,0:T(1,128)}', space=vmem, size = 0x12000, scoped, tag = 'internal scratch']
  %s0 = inlined_call_operand.hbm [shape: f32[1,64], index: 0, kind: input, shape index: {}]
  %s1 = inlined_call_operand.hbm [shape: f32[13,64,64], index: 1, kind: input, shape index: {}]
  %s2 = inlined_call_operand.hbm [shape: f32[13,1,64], index: 2, kind: input, shape index: {}]
  %s3 = inlined_call_operand.hbm [shape: f32[1,64], index: 3, kind: output, shape index: {}]
  %s4 = sld [smem:[#allocation0]]
  $region34: #{tpu_custom_call.1} parent=0
    _
  %s6 = ssub.s32 1, %s4
  %s7 = scalar_select 0, %s6, %s4
  $region1: #{tpu_custom_call.1} parent=0
    #allocation2 [shape = 'u8[512]{0}', space=vmem, size = 0x400, scoped, tag = 'input window, operand 0, single buffered']
    #allocation3 [shape = 's32[1]{0}', space=sflag, size = 0x4, scoped, tag = 'scoped memory for tpu_custom_call.1']
    #allocation4 [shape = 's32[1]{0}', space=sflag, size = 0x4, scoped, tag = 'scoped memory for tpu_custom_call.1']
    #allocation5 [shape = 'u8[425984]{0}', space=vmem, size = 0x68000, scoped, tag = 'input window, operand 1, single buffered']
    #allocation6 [shape = 's32[1]{0}', space=sflag, size = 0x4, scoped, tag = 'scoped memory for tpu_custom_call.1']
    #allocation7 [shape = 'u8[6656]{0}', space=vmem, size = 0x1c00, scoped, tag = 'input window, operand 2, single buffered']
    #allocation8 [shape = 'u8[512]{0}', space=vmem, size = 0x400, scoped, tag = 'output window, operand 0, single buffered']
    %8 = vsyncpa [#allocation3], 0
    %9 = vsyncpa [#allocation6], 0
    %10 = vsyncpa [#allocation4], 0
    // Predicated region
    $region2: #{tpu_custom_call.1} parent=1 // pred_check
      _
    $region3: #{tpu_custom_call.1} parent=1 // pred_check_branch
      %12 = sbr.rel (0) target = $region5
    $region4: #{tpu_custom_call.1} parent=1 // pred_region
      %s14 = ssub.s32 16, 16
      %15 = vsyncadd [#allocation3], %s14
      %s17 = sshll.u32 [#allocation2], 4
      %s18 = int_to_ptr.vmem [resolvable:$true] %s17
      %20 = dma.hbm_to_vmem [thread:$0]  %s0, 16, %s18, [#allocation3]
    $region5: #{tpu_custom_call.1} parent=1 // pred_fallthru
      _
    // Predicated region
    $region6: #{tpu_custom_call.1} parent=1 // pred_check
      _
    $region7: #{tpu_custom_call.1} parent=1 // pred_check_branch
      %22 = sbr.rel (0) target = $region9
    $region8: #{tpu_custom_call.1} parent=1 // pred_region
      %s24 = ssub.s32 13312, 13312
      %25 = vsyncadd [#allocation6], %s24
      %s26 = sshll.u32 [#allocation5], 4
      %s27 = int_to_ptr.vmem [resolvable:$true] %s26
      %32 = dma.hbm_to_vmem [thread:$0]  %s1, 13312, %s27, [#allocation6], 128, 128, 8
    $region9: #{tpu_custom_call.1} parent=1 // pred_fallthru
      _
    // Predicated region
    $region10: #{tpu_custom_call.1} parent=1 // pred_check
      _
    $region11: #{tpu_custom_call.1} parent=1 // pred_check_branch
      %34 = sbr.rel (0) target = $region13
    $region12: #{tpu_custom_call.1} parent=1 // pred_region
      %s36 = ssub.s32 208, 208
      %37 = vsyncadd [#allocation6], %s36
      %s38 = sshll.u32 [#allocation7], 4
      %s39 = int_to_ptr.vmem [resolvable:$true] %s38
      %44 = dma.hbm_to_vmem [thread:$0]  %s2, 208, %s39, [#allocation6], 16, 16, 1
    $region13: #{tpu_custom_call.1} parent=1 // pred_fallthru
      _
    // Predicated region
    $region14: #{tpu_custom_call.1} parent=1 // pred_check
      _
    $region15: #{tpu_custom_call.1} parent=1 // pred_check_branch
      %46 = sbr.rel (0) target = $region17
    $region16: #{tpu_custom_call.1} parent=1 // pred_region
      %47 = dma.done [#allocation3], 16
    $region17: #{tpu_custom_call.1} parent=1 // pred_fallthru
      _
    // Predicated region
    $region18: #{tpu_custom_call.1} parent=1 // pred_check
      _
    $region19: #{tpu_custom_call.1} parent=1 // pred_check_branch
      %49 = sbr.rel (0) target = $region21
    $region20: #{tpu_custom_call.1} parent=1 // pred_region
      %50 = dma.done [#allocation6], 13312
    $region21: #{tpu_custom_call.1} parent=1 // pred_fallthru
      _
    // Predicated region
    $region22: #{tpu_custom_call.1} parent=1 // pred_check
      _
    $region23: #{tpu_custom_call.1} parent=1 // pred_check_branch
      %52 = sbr.rel (0) target = $region25
    $region24: #{tpu_custom_call.1} parent=1 // pred_region
      %53 = dma.done [#allocation6], 208
    $region25: #{tpu_custom_call.1} parent=1 // pred_fallthru
      _
    %v54 = vld [vmem:[#allocation2] sm:$0x1]
    %v55 = vld [vmem:[#allocation5] sm:$0xff]
    %v56 = vld [vmem:[#allocation5 + $0x8] sm:$0xff]
    %v57 = vld [vmem:[#allocation5 + $0x10] sm:$0xff]
    %v58 = vld [vmem:[#allocation5 + $0x18] sm:$0xff]
    %v59 = vld [vmem:[#allocation5 + $0x20] sm:$0xff]
    %v60 = vld [vmem:[#allocation5 + $0x28] sm:$0xff]
    %v61 = vld [vmem:[#allocation5 + $0x30] sm:$0xff]
    %v62 = vld [vmem:[#allocation5 + $0x38] sm:$0xff]
    %v63 = vld [vmem:[#allocation7] sm:$0x1]
    %vm64 = vcmask 523264
    %v66 = vsel %vm64, %v54, 0
    %68 = vmatprep.subr.mxu0 0.0
    %69 = vmatpush1.msra.mxu0 %v55
    %70 = vmatprep.subr.mxu0 0.0
    %71 = vmatpush1.msra.mxu0 %v56
    %72 = vmatprep.subr.mxu0 0.0
    %73 = vmatpush1.msra.mxu0 %v57
    %74 = vmatprep.subr.mxu0 0.0
    %75 = vmatpush1.msra.mxu0 %v58
    %76 = vmatprep.subr.mxu0 0.0
    %77 = vmatpush1.msra.mxu0 %v59
    %78 = vmatprep.subr.mxu0 0.0
    %79 = vmatpush1.msra.mxu0 %v60
    %80 = vmatprep.subr.mxu0 0.0
    %81 = vmatpush1.msra.mxu0 %v61
    %82 = vmatprep.subr.mxu0 0.0
    %83 = vmatpush1.msra.mxu0 %v62
    %84 = vmatprep.subr.mxu0 0.0
    %85 = vmatpush1.msra.mxu0 0.0
    %86 = vmatprep.subr.mxu0 0.0
    %87 = vmatpush1.msra.mxu0 0.0
    %88 = vmatprep.subr.mxu0 0.0
    %89 = vmatpush1.msra.mxu0 0.0
    %90 = vmatprep.subr.mxu0 0.0
    %91 = vmatpush1.msra.mxu0 0.0
    %92 = vmatprep.subr.mxu0 0.0
    %93 = vmatpush1.msra.mxu0 0.0
    %94 = vmatprep.subr.mxu0 0.0
    %95 = vmatpush1.msra.mxu0 0.0
    %96 = vmatprep.subr.mxu0 0.0
    %97 = vmatpush1.msra.mxu0 0.0
    %98 = vmatprep.subr.mxu0 0.0
    %99 = vmatpush1.msra.mxu0 0.0
    %100 = vmatprep.subr.mxu0 0.0
    %101 = vmatpush1.msra.mxu0 0.0
    %102 = vmatprep.subr.mxu0 0.0
    %103 = vmatpush1.msra.mxu0 0.0
    %104 = vmatprep.subr.mxu0 0.0
    %105 = vmatpush1.msra.mxu0 0.0
    %106 = vmatprep.subr.mxu0 0.0
    %107 = vmatpush1.msra.mxu0 0.0
    %108 = vmatprep.subr.mxu0 0.0
    %109 = vmatpush1.msra.mxu0 0.0
    %110 = vmatprep.subr.mxu0 0.0
    %111 = vmatpush1.msra.mxu0 0.0
    %112 = vmatprep.subr.mxu0 0.0
    %113 = vmatpush1.msra.mxu0 0.0
    %114 = vmatprep.subr.mxu0 0.0
    %115 = vmatpush1.msra.mxu0 0.0
    %116 = vmatprep.subr.mxu0 0.0
    %117 = vmatpush1.msra.mxu0 0.0
    %118 = vmatprep.subr.mxu0 0.0
    %119 = vmatpush1.msra.mxu0 0.0
    %120 = vmatprep.subr.mxu0 0.0
    %121 = vmatpush1.msra.mxu0 0.0
    %122 = vmatprep.subr.mxu0 0.0
    %123 = vmatpush1.msra.mxu0 0.0
    %124 = vmatprep.subr.mxu0 0.0
    %125 = vmatpush1.msra.mxu0 0.0
    %126 = vmatprep.subr.mxu0 0.0
    %127 = vmatpush1.msra.mxu0 0.0
    %128 = vmatprep.subr.mxu0 0.0
    %129 = vmatpush1.msra.mxu0 0.0
    %130 = vmatprep.subr.mxu0 0.0
    %131 = vmatpush1.msra.mxu0 0.0
    %132 = vmatprep.mubr.f32.mxu0 0.0
    %133 = vmatmul.mubr.f32.gmra.mrb[0].mxu0 %v66
    %v134 = vpop.f32.mrb[0].mxu0
    %v135 = vadd.f32 %v63, %v134
    %v136 = vpop.f32.mrb[0].mxu0
    %137 = vdwg.mxu0
    %v138 = vmax.f32 %v54, 0.0
    %vm139 = vcmp.ne.f32.partialorder %v54, %v54
    %v140 = vadd.f32 %v54, 0.0
    %v141 = vand.u32 2147483647, %v54
    %v142 = vsub.f32 0.0, %v141
    %v143 = vmul.f32 %v142, 1.442695
    %v144 = vpow.pop %v143
    %v145 = vadd.f32 %v144, 1.0
    %v146 = vlog2.pop %v145
    %v147 = vmul.f32 %v146, 0.6931472
    %v148 = vmul.f32 -0.5, %v144
    %v149 = vadd.f32 %v148, 1.0
    %v150 = vmul.f32 %v149, %v144
    %v151 = vand.u32 2147483647, %v144
    %vm152 = vcmp.lt.f32.partialorder %v151, 0.0004427343
    %v153 = vsel %vm152, %v150, %v147
    %v154 = vadd.f32 %v138, %v153
    %v155 = vsel %vm139, %v140, %v154
    %v156 = vtanh.pop %v155
    %v157 = vmul.f32 %v54, %v156
    %s158 = scalar_lea.vmem [#allocation5], 64
    %v159 = vld [vmem:[%s158] sm:$0xff]
    %v160 = vld [vmem:[%s158 + $0x8] sm:$0xff]
    %v161 = vld [vmem:[%s158 + $0x10] sm:$0xff]
    %v162 = vld [vmem:[%s158 + $0x18] sm:$0xff]
    %v163 = vld [vmem:[%s158 + $0x20] sm:$0xff]
    %v164 = vld [vmem:[%s158 + $0x28] sm:$0xff]
    %v165 = vld [vmem:[%s158 + $0x30] sm:$0xff]
    %v166 = vld [vmem:[%s158 + $0x38] sm:$0xff]
    %s167 = scalar_lea.vmem [#allocation7], 1
    %v168 = vld [vmem:[%s167] sm:$0x1]
    %v170 = vsel %vm64, %v157, 0
    %172 = vmatprep.subr.mxu0 0.0
    %173 = vmatpush1.msra.mxu0 %v159
    %174 = vmatprep.subr.mxu0 0.0
    %175 = vmatpush1.msra.mxu0 %v160
    %176 = vmatprep.subr.mxu0 0.0
    %177 = vmatpush1.msra.mxu0 %v161
    %178 = vmatprep.subr.mxu0 0.0
    %179 = vmatpush1.msra.mxu0 %v162
    %180 = vmatprep.subr.mxu0 0.0
    %181 = vmatpush1.msra.mxu0 %v163
    %182 = vmatprep.subr.mxu0 0.0
    %183 = vmatpush1.msra.mxu0 %v164
    %184 = vmatprep.subr.mxu0 0.0
    %185 = vmatpush1.msra.mxu0 %v165
    %186 = vmatprep.subr.mxu0 0.0
    %187 = vmatpush1.msra.mxu0 %v166
    %188 = vmatprep.subr.mxu0 0.0
    %189 = vmatpush1.msra.mxu0 0.0
    %190 = vmatprep.subr.mxu0 0.0
    %191 = vmatpush1.msra.mxu0 0.0
    %192 = vmatprep.subr.mxu0 0.0
    %193 = vmatpush1.msra.mxu0 0.0
    %194 = vmatprep.subr.mxu0 0.0
    %195 = vmatpush1.msra.mxu0 0.0
    %196 = vmatprep.subr.mxu0 0.0
    %197 = vmatpush1.msra.mxu0 0.0
    %198 = vmatprep.subr.mxu0 0.0
    %199 = vmatpush1.msra.mxu0 0.0
    %200 = vmatprep.subr.mxu0 0.0
    %201 = vmatpush1.msra.mxu0 0.0
    %202 = vmatprep.subr.mxu0 0.0
    %203 = vmatpush1.msra.mxu0 0.0
    %204 = vmatprep.subr.mxu0 0.0
    %205 = vmatpush1.msra.mxu0 0.0
    %206 = vmatprep.subr.mxu0 0.0
    %207 = vmatpush1.msra.mxu0 0.0
    %208 = vmatprep.subr.mxu0 0.0
    %209 = vmatpush1.msra.mxu0 0.0
    %210 = vmatprep.subr.mxu0 0.0
    %211 = vmatpush1.msra.mxu0 0.0
    %212 = vmatprep.subr.mxu0 0.0
    %213 = vmatpush1.msra.mxu0 0.0
    %214 = vmatprep.subr.mxu0 0.0
    %215 = vmatpush1.msra.mxu0 0.0
    %216 = vmatprep.subr.mxu0 0.0
    %217 = vmatpush1.msra.mxu0 0.0
    %218 = vmatprep.subr.mxu0 0.0
    %219 = vmatpush1.msra.mxu0 0.0
    %220 = vmatprep.subr.mxu0 0.0
    %221 = vmatpush1.msra.mxu0 0.0
    %222 = vmatprep.subr.mxu0 0.0
    %223 = vmatpush1.msra.mxu0 0.0
    %224 = vmatprep.subr.mxu0 0.0
    %225 = vmatpush1.msra.mxu0 0.0
    %226 = vmatprep.subr.mxu0 0.0
    %227 = vmatpush1.msra.mxu0 0.0
    %228 = vmatprep.subr.mxu0 0.0
    %229 = vmatpush1.msra.mxu0 0.0
    %230 = vmatprep.subr.mxu0 0.0
    %231 = vmatpush1.msra.mxu0 0.0
    %232 = vmatprep.subr.mxu0 0.0
    %233 = vmatpush1.msra.mxu0 0.0
    %234 = vmatprep.subr.mxu0 0.0
    %235 = vmatpush1.msra.mxu0 0.0
    %236 = vmatprep.mubr.f32.mxu0 0.0
    %237 = vmatmul.mubr.f32.gmra.mrb[0].mxu0 %v170
    %v238 = vpop.f32.mrb[0].mxu0
    %v239 = vadd.f32 %v168, %v238
    %v240 = vpop.f32.mrb[0].mxu0
    %241 = vdwg.mxu0
    %v242 = vmax.f32 %v239, 0.0
    %vm243 = vcmp.ne.f32.partialorder %v239, %v239
    %v244 = vadd.f32 %v239, 0.0
    %v245 = vand.u32 2147483647, %v239
    %v246 = vsub.f32 0.0, %v245
    %v247 = vmul.f32 %v246, 1.442695
    %v248 = vpow.pop %v247
    %v249 = vadd.f32 %v248, 1.0
    %v250 = vlog2.pop %v249
    %v251 = vmul.f32 %v250, 0.6931472
    %v252 = vmul.f32 -0.5, %v248
    %v253 = vadd.f32 %v252, 1.0
    %v254 = vmul.f32 %v253, %v248
    %v255 = vand.u32 2147483647, %v248
    %vm256 = vcmp.lt.f32.partialorder %v255, 0.0004427343
    %v257 = vsel %vm256, %v254, %v251
    %v258 = vadd.f32 %v242, %v257
    %v259 = vsel %vm243, %v244, %v258
    %v260 = vtanh.pop %v259
    %v261 = vmul.f32 %v239, %v260
    %s262 = scalar_lea.vmem [#allocation5], 128
    %v263 = vld [vmem:[%s262] sm:$0xff]
    %v264 = vld [vmem:[%s262 + $0x8] sm:$0xff]
    %v265 = vld [vmem:[%s262 + $0x10] sm:$0xff]
    %v266 = vld [vmem:[%s262 + $0x18] sm:$0xff]
    %v267 = vld [vmem:[%s262 + $0x20] sm:$0xff]
    %v268 = vld [vmem:[%s262 + $0x28] sm:$0xff]
    %v269 = vld [vmem:[%s262 + $0x30] sm:$0xff]
    %v270 = vld [vmem:[%s262 + $0x38] sm:$0xff]
    %s271 = scalar_lea.vmem [#allocation7], 2
    %v272 = vld [vmem:[%s271] sm:$0x1]
    %v274 = vsel %vm64, %v261, 0
    %276 = vmatprep.subr.mxu0 0.0
    %277 = vmatpush1.msra.mxu0 %v263
    %278 = vmatprep.subr.mxu0 0.0
    %279 = vmatpush1.msra.mxu0 %v264
    %280 = vmatprep.subr.mxu0 0.0
    %281 = vmatpush1.msra.mxu0 %v265
    %282 = vmatprep.subr.mxu0 0.0
    %283 = vmatpush1.msra.mxu0 %v266
    %284 = vmatprep.subr.mxu0 0.0
    %285 = vmatpush1.msra.mxu0 %v267
    %286 = vmatprep.subr.mxu0 0.0
    %287 = vmatpush1.msra.mxu0 %v268
    %288 = vmatprep.subr.mxu0 0.0
    %289 = vmatpush1.msra.mxu0 %v269
    %290 = vmatprep.subr.mxu0 0.0
    %291 = vmatpush1.msra.mxu0 %v270
    %292 = vmatprep.subr.mxu0 0.0
    %293 = vmatpush1.msra.mxu0 0.0
    %294 = vmatprep.subr.mxu0 0.0
    %295 = vmatpush1.msra.mxu0 0.0
    %296 = vmatprep.subr.mxu0 0.0
    %297 = vmatpush1.msra.mxu0 0.0
    %298 = vmatprep.subr.mxu0 0.0
    %299 = vmatpush1.msra.mxu0 0.0
    %300 = vmatprep.subr.mxu0 0.0
    %301 = vmatpush1.msra.mxu0 0.0
    %302 = vmatprep.subr.mxu0 0.0
    %303 = vmatpush1.msra.mxu0 0.0
    %304 = vmatprep.subr.mxu0 0.0
    %305 = vmatpush1.msra.mxu0 0.0
    %306 = vmatprep.subr.mxu0 0.0
    %307 = vmatpush1.msra.mxu0 0.0
    %308 = vmatprep.subr.mxu0 0.0
    %309 = vmatpush1.msra.mxu0 0.0
    %310 = vmatprep.subr.mxu0 0.0
    %311 = vmatpush1.msra.mxu0 0.0
    %312 = vmatprep.subr.mxu0 0.0
    %313 = vmatpush1.msra.mxu0 0.0
    %314 = vmatprep.subr.mxu0 0.0
    %315 = vmatpush1.msra.mxu0 0.0
    %316 = vmatprep.subr.mxu0 0.0
    %317 = vmatpush1.msra.mxu0 0.0
    %318 = vmatprep.subr.mxu0 0.0
    %319 = vmatpush1.msra.mxu0 0.0
    %320 = vmatprep.subr.mxu0 0.0
    %321 = vmatpush1.msra.mxu0 0.0
    %322 = vmatprep.subr.mxu0 0.0
    %323 = vmatpush1.msra.mxu0 0.0
    %324 = vmatprep.subr.mxu0 0.0
    %325 = vmatpush1.msra.mxu0 0.0
    %326 = vmatprep.subr.mxu0 0.0
    %327 = vmatpush1.msra.mxu0 0.0
    %328 = vmatprep.subr.mxu0 0.0
    %329 = vmatpush1.msra.mxu0 0.0
    %330 = vmatprep.subr.mxu0 0.0
    %331 = vmatpush1.msra.mxu0 0.0
    %332 = vmatprep.subr.mxu0 0.0
    %333 = vmatpush1.msra.mxu0 0.0
    %334 = vmatprep.subr.mxu0 0.0
    %335 = vmatpush1.msra.mxu0 0.0
    %336 = vmatprep.subr.mxu0 0.0
    %337 = vmatpush1.msra.mxu0 0.0
    %338 = vmatprep.subr.mxu0 0.0
    %339 = vmatpush1.msra.mxu0 0.0
    %340 = vmatprep.mubr.f32.mxu0 0.0
    %341 = vmatmul.mubr.f32.gmra.mrb[0].mxu0 %v274
    %v342 = vpop.f32.mrb[0].mxu0
    %v343 = vadd.f32 %v272, %v342
    %v344 = vpop.f32.mrb[0].mxu0
    %345 = vdwg.mxu0
    %v346 = vadd.f32 %v135, %v343
    %s347 = scalar_lea.vmem [#allocation5], 192
    %v348 = vld [vmem:[%s347] sm:$0xff]
    %v349 = vld [vmem:[%s347 + $0x8] sm:$0xff]
    %v350 = vld [vmem:[%s347 + $0x10] sm:$0xff]
    %v351 = vld [vmem:[%s347 + $0x18] sm:$0xff]
    %v352 = vld [vmem:[%s347 + $0x20] sm:$0xff]
    %v353 = vld [vmem:[%s347 + $0x28] sm:$0xff]
    %v354 = vld [vmem:[%s347 + $0x30] sm:$0xff]
    %v355 = vld [vmem:[%s347 + $0x38] sm:$0xff]
    %s356 = scalar_lea.vmem [#allocation7], 3
    %v357 = vld [vmem:[%s356] sm:$0x1]
    %v359 = vsel %vm64, %v346, 0
    %361 = vmatprep.subr.mxu0 0.0
    %362 = vmatpush1.msra.mxu0 %v348
    %363 = vmatprep.subr.mxu0 0.0
    %364 = vmatpush1.msra.mxu0 %v349
    %365 = vmatprep.subr.mxu0 0.0
    %366 = vmatpush1.msra.mxu0 %v350
    %367 = vmatprep.subr.mxu0 0.0
    %368 = vmatpush1.msra.mxu0 %v351
    %369 = vmatprep.subr.mxu0 0.0
    %370 = vmatpush1.msra.mxu0 %v352
    %371 = vmatprep.subr.mxu0 0.0
    %372 = vmatpush1.msra.mxu0 %v353
    %373 = vmatprep.subr.mxu0 0.0
    %374 = vmatpush1.msra.mxu0 %v354
    %375 = vmatprep.subr.mxu0 0.0
    %376 = vmatpush1.msra.mxu0 %v355
    %377 = vmatprep.subr.mxu0 0.0
    %378 = vmatpush1.msra.mxu0 0.0
    %379 = vmatprep.subr.mxu0 0.0
    %380 = vmatpush1.msra.mxu0 0.0
    %381 = vmatprep.subr.mxu0 0.0
    %382 = vmatpush1.msra.mxu0 0.0
    %383 = vmatprep.subr.mxu0 0.0
    %384 = vmatpush1.msra.mxu0 0.0
    %385 = vmatprep.subr.mxu0 0.0
    %386 = vmatpush1.msra.mxu0 0.0
    %387 = vmatprep.subr.mxu0 0.0
    %388 = vmatpush1.msra.mxu0 0.0
    %389 = vmatprep.subr.mxu0 0.0
    %390 = vmatpush1.msra.mxu0 0.0
    %391 = vmatprep.subr.mxu0 0.0
    %392 = vmatpush1.msra.mxu0 0.0
    %393 = vmatprep.subr.mxu0 0.0
    %394 = vmatpush1.msra.mxu0 0.0
    %395 = vmatprep.subr.mxu0 0.0
    %396 = vmatpush1.msra.mxu0 0.0
    %397 = vmatprep.subr.mxu0 0.0
    %398 = vmatpush1.msra.mxu0 0.0
    %399 = vmatprep.subr.mxu0 0.0
    %400 = vmatpush1.msra.mxu0 0.0
    %401 = vmatprep.subr.mxu0 0.0
    %402 = vmatpush1.msra.mxu0 0.0
    %403 = vmatprep.subr.mxu0 0.0
    %404 = vmatpush1.msra.mxu0 0.0
    %405 = vmatprep.subr.mxu0 0.0
    %406 = vmatpush1.msra.mxu0 0.0
    %407 = vmatprep.subr.mxu0 0.0
    %408 = vmatpush1.msra.mxu0 0.0
    %409 = vmatprep.subr.mxu0 0.0
    %410 = vmatpush1.msra.mxu0 0.0
    %411 = vmatprep.subr.mxu0 0.0
    %412 = vmatpush1.msra.mxu0 0.0
    %413 = vmatprep.subr.mxu0 0.0
    %414 = vmatpush1.msra.mxu0 0.0
    %415 = vmatprep.subr.mxu0 0.0
    %416 = vmatpush1.msra.mxu0 0.0
    %417 = vmatprep.subr.mxu0 0.0
    %418 = vmatpush1.msra.mxu0 0.0
    %419 = vmatprep.subr.mxu0 0.0
    %420 = vmatpush1.msra.mxu0 0.0
    %421 = vmatprep.subr.mxu0 0.0
    %422 = vmatpush1.msra.mxu0 0.0
    %423 = vmatprep.subr.mxu0 0.0
    %424 = vmatpush1.msra.mxu0 0.0
    %425 = vmatprep.mubr.f32.mxu0 0.0
    %426 = vmatmul.mubr.f32.gmra.mrb[0].mxu0 %v359
    %v427 = vpop.f32.mrb[0].mxu0
    %v428 = vadd.f32 %v357, %v427
    %v429 = vpop.f32.mrb[0].mxu0
    %430 = vdwg.mxu0
    %v431 = vmax.f32 %v346, 0.0
    %vm432 = vcmp.ne.f32.partialorder %v346, %v346
    %v433 = vadd.f32 %v346, 0.0
    %v434 = vand.u32 2147483647, %v346
    %v435 = vsub.f32 0.0, %v434
    %v436 = vmul.f32 %v435, 1.442695
    %v437 = vpow.pop %v436
    %v438 = vadd.f32 %v437, 1.0
    %v439 = vlog2.pop %v438
    %v440 = vmul.f32 %v439, 0.6931472
    %v441 = vmul.f32 -0.5, %v437
    %v442 = vadd.f32 %v441, 1.0
    %v443 = vmul.f32 %v442, %v437
    %v444 = vand.u32 2147483647, %v437
    %vm445 = vcmp.lt.f32.partialorder %v444, 0.0004427343
    %v446 = vsel %vm445, %v443, %v440
    %v447 = vadd.f32 %v431, %v446
    %v448 = vsel %vm432, %v433, %v447
    %v449 = vtanh.pop %v448
    %v450 = vmul.f32 %v346, %v449
    %s451 = scalar_lea.vmem [#allocation5], 256
    %v452 = vld [vmem:[%s451] sm:$0xff]
    %v453 = vld [vmem:[%s451 + $0x8] sm:$0xff]
    %v454 = vld [vmem:[%s451 + $0x10] sm:$0xff]
    %v455 = vld [vmem:[%s451 + $0x18] sm:$0xff]
    %v456 = vld [vmem:[%s451 + $0x20] sm:$0xff]
    %v457 = vld [vmem:[%s451 + $0x28] sm:$0xff]
    %v458 = vld [vmem:[%s451 + $0x30] sm:$0xff]
    %v459 = vld [vmem:[%s451 + $0x38] sm:$0xff]
    %s460 = scalar_lea.vmem [#allocation7], 4
    %v461 = vld [vmem:[%s460] sm:$0x1]
    %v463 = vsel %vm64, %v450, 0
    %465 = vmatprep.subr.mxu0 0.0
    %466 = vmatpush1.msra.mxu0 %v452
    %467 = vmatprep.subr.mxu0 0.0
    %468 = vmatpush1.msra.mxu0 %v453
    %469 = vmatprep.subr.mxu0 0.0
    %470 = vmatpush1.msra.mxu0 %v454
    %471 = vmatprep.subr.mxu0 0.0
    %472 = vmatpush1.msra.mxu0 %v455
    %473 = vmatprep.subr.mxu0 0.0
    %474 = vmatpush1.msra.mxu0 %v456
    %475 = vmatprep.subr.mxu0 0.0
    %476 = vmatpush1.msra.mxu0 %v457
    %477 = vmatprep.subr.mxu0 0.0
    %478 = vmatpush1.msra.mxu0 %v458
    %479 = vmatprep.subr.mxu0 0.0
    %480 = vmatpush1.msra.mxu0 %v459
    %481 = vmatprep.subr.mxu0 0.0
    %482 = vmatpush1.msra.mxu0 0.0
    %483 = vmatprep.subr.mxu0 0.0
    %484 = vmatpush1.msra.mxu0 0.0
    %485 = vmatprep.subr.mxu0 0.0
    %486 = vmatpush1.msra.mxu0 0.0
    %487 = vmatprep.subr.mxu0 0.0
    %488 = vmatpush1.msra.mxu0 0.0
    %489 = vmatprep.subr.mxu0 0.0
    %490 = vmatpush1.msra.mxu0 0.0
    %491 = vmatprep.subr.mxu0 0.0
    %492 = vmatpush1.msra.mxu0 0.0
    %493 = vmatprep.subr.mxu0 0.0
    %494 = vmatpush1.msra.mxu0 0.0
    %495 = vmatprep.subr.mxu0 0.0
    %496 = vmatpush1.msra.mxu0 0.0
    %497 = vmatprep.subr.mxu0 0.0
    %498 = vmatpush1.msra.mxu0 0.0
    %499 = vmatprep.subr.mxu0 0.0
    %500 = vmatpush1.msra.mxu0 0.0
    %501 = vmatprep.subr.mxu0 0.0
    %502 = vmatpush1.msra.mxu0 0.0
    %503 = vmatprep.subr.mxu0 0.0
    %504 = vmatpush1.msra.mxu0 0.0
    %505 = vmatprep.subr.mxu0 0.0
    %506 = vmatpush1.msra.mxu0 0.0
    %507 = vmatprep.subr.mxu0 0.0
    %508 = vmatpush1.msra.mxu0 0.0
    %509 = vmatprep.subr.mxu0 0.0
    %510 = vmatpush1.msra.mxu0 0.0
    %511 = vmatprep.subr.mxu0 0.0
    %512 = vmatpush1.msra.mxu0 0.0
    %513 = vmatprep.subr.mxu0 0.0
    %514 = vmatpush1.msra.mxu0 0.0
    %515 = vmatprep.subr.mxu0 0.0
    %516 = vmatpush1.msra.mxu0 0.0
    %517 = vmatprep.subr.mxu0 0.0
    %518 = vmatpush1.msra.mxu0 0.0
    %519 = vmatprep.subr.mxu0 0.0
    %520 = vmatpush1.msra.mxu0 0.0
    %521 = vmatprep.subr.mxu0 0.0
    %522 = vmatpush1.msra.mxu0 0.0
    %523 = vmatprep.subr.mxu0 0.0
    %524 = vmatpush1.msra.mxu0 0.0
    %525 = vmatprep.subr.mxu0 0.0
    %526 = vmatpush1.msra.mxu0 0.0
    %527 = vmatprep.subr.mxu0 0.0
    %528 = vmatpush1.msra.mxu0 0.0
    %529 = vmatprep.mubr.f32.mxu0 0.0
    %530 = vmatmul.mubr.f32.gmra.mrb[0].mxu0 %v463
    %v531 = vpop.f32.mrb[0].mxu0
    %v532 = vadd.f32 %v461, %v531
    %v533 = vpop.f32.mrb[0].mxu0
    %534 = vdwg.mxu0
    %v535 = vmax.f32 %v532, 0.0
    %vm536 = vcmp.ne.f32.partialorder %v532, %v532
    %v537 = vadd.f32 %v532, 0.0
    %v538 = vand.u32 2147483647, %v532
    %v539 = vsub.f32 0.0, %v538
    %v540 = vmul.f32 %v539, 1.442695
    %v541 = vpow.pop %v540
    %v542 = vadd.f32 %v541, 1.0
    %v543 = vlog2.pop %v542
    %v544 = vmul.f32 %v543, 0.6931472
    %v545 = vmul.f32 -0.5, %v541
    %v546 = vadd.f32 %v545, 1.0
    %v547 = vmul.f32 %v546, %v541
    %v548 = vand.u32 2147483647, %v541
    %vm549 = vcmp.lt.f32.partialorder %v548, 0.0004427343
    %v550 = vsel %vm549, %v547, %v544
    %v551 = vadd.f32 %v535, %v550
    %v552 = vsel %vm536, %v537, %v551
    %v553 = vtanh.pop %v552
    %v554 = vmul.f32 %v532, %v553
    %s555 = scalar_lea.vmem [#allocation5], 320
    %v556 = vld [vmem:[%s555] sm:$0xff]
    %v557 = vld [vmem:[%s555 + $0x8] sm:$0xff]
    %v558 = vld [vmem:[%s555 + $0x10] sm:$0xff]
    %v559 = vld [vmem:[%s555 + $0x18] sm:$0xff]
    %v560 = vld [vmem:[%s555 + $0x20] sm:$0xff]
    %v561 = vld [vmem:[%s555 + $0x28] sm:$0xff]
    %v562 = vld [vmem:[%s555 + $0x30] sm:$0xff]
    %v563 = vld [vmem:[%s555 + $0x38] sm:$0xff]
    %s564 = scalar_lea.vmem [#allocation7], 5
    %v565 = vld [vmem:[%s564] sm:$0x1]
    %v567 = vsel %vm64, %v554, 0
    %569 = vmatprep.subr.mxu0 0.0
    %570 = vmatpush1.msra.mxu0 %v556
    %571 = vmatprep.subr.mxu0 0.0
    %572 = vmatpush1.msra.mxu0 %v557
    %573 = vmatprep.subr.mxu0 0.0
    %574 = vmatpush1.msra.mxu0 %v558
    %575 = vmatprep.subr.mxu0 0.0
    %576 = vmatpush1.msra.mxu0 %v559
    %577 = vmatprep.subr.mxu0 0.0
    %578 = vmatpush1.msra.mxu0 %v560
    %579 = vmatprep.subr.mxu0 0.0
    %580 = vmatpush1.msra.mxu0 %v561
    %581 = vmatprep.subr.mxu0 0.0
    %582 = vmatpush1.msra.mxu0 %v562
    %583 = vmatprep.subr.mxu0 0.0
    %584 = vmatpush1.msra.mxu0 %v563
    %585 = vmatprep.subr.mxu0 0.0
    %586 = vmatpush1.msra.mxu0 0.0
    %587 = vmatprep.subr.mxu0 0.0
    %588 = vmatpush1.msra.mxu0 0.0
    %589 = vmatprep.subr.mxu0 0.0
    %590 = vmatpush1.msra.mxu0 0.0
    %591 = vmatprep.subr.mxu0 0.0
    %592 = vmatpush1.msra.mxu0 0.0
    %593 = vmatprep.subr.mxu0 0.0
    %594 = vmatpush1.msra.mxu0 0.0
    %595 = vmatprep.subr.mxu0 0.0
    %596 = vmatpush1.msra.mxu0 0.0
    %597 = vmatprep.subr.mxu0 0.0
    %598 = vmatpush1.msra.mxu0 0.0
    %599 = vmatprep.subr.mxu0 0.0
    %600 = vmatpush1.msra.mxu0 0.0
    %601 = vmatprep.subr.mxu0 0.0
    %602 = vmatpush1.msra.mxu0 0.0
    %603 = vmatprep.subr.mxu0 0.0
    %604 = vmatpush1.msra.mxu0 0.0
    %605 = vmatprep.subr.mxu0 0.0
    %606 = vmatpush1.msra.mxu0 0.0
    %607 = vmatprep.subr.mxu0 0.0
    %608 = vmatpush1.msra.mxu0 0.0
    %609 = vmatprep.subr.mxu0 0.0
    %610 = vmatpush1.msra.mxu0 0.0
    %611 = vmatprep.subr.mxu0 0.0
    %612 = vmatpush1.msra.mxu0 0.0
    %613 = vmatprep.subr.mxu0 0.0
    %614 = vmatpush1.msra.mxu0 0.0
    %615 = vmatprep.subr.mxu0 0.0
    %616 = vmatpush1.msra.mxu0 0.0
    %617 = vmatprep.subr.mxu0 0.0
    %618 = vmatpush1.msra.mxu0 0.0
    %619 = vmatprep.subr.mxu0 0.0
    %620 = vmatpush1.msra.mxu0 0.0
    %621 = vmatprep.subr.mxu0 0.0
    %622 = vmatpush1.msra.mxu0 0.0
    %623 = vmatprep.subr.mxu0 0.0
    %624 = vmatpush1.msra.mxu0 0.0
    %625 = vmatprep.subr.mxu0 0.0
    %626 = vmatpush1.msra.mxu0 0.0
    %627 = vmatprep.subr.mxu0 0.0
    %628 = vmatpush1.msra.mxu0 0.0
    %629 = vmatprep.subr.mxu0 0.0
    %630 = vmatpush1.msra.mxu0 0.0
    %631 = vmatprep.subr.mxu0 0.0
    %632 = vmatpush1.msra.mxu0 0.0
    %633 = vmatprep.mubr.f32.mxu0 0.0
    %634 = vmatmul.mubr.f32.gmra.mrb[0].mxu0 %v567
    %v635 = vpop.f32.mrb[0].mxu0
    %v636 = vadd.f32 %v565, %v635
    %v637 = vpop.f32.mrb[0].mxu0
    %638 = vdwg.mxu0
    %v639 = vadd.f32 %v428, %v636
    %s640 = scalar_lea.vmem [#allocation5], 384
    %v641 = vld [vmem:[%s640] sm:$0xff]
    %v642 = vld [vmem:[%s640 + $0x8] sm:$0xff]
    %v643 = vld [vmem:[%s640 + $0x10] sm:$0xff]
    %v644 = vld [vmem:[%s640 + $0x18] sm:$0xff]
    %v645 = vld [vmem:[%s640 + $0x20] sm:$0xff]
    %v646 = vld [vmem:[%s640 + $0x28] sm:$0xff]
    %v647 = vld [vmem:[%s640 + $0x30] sm:$0xff]
    %v648 = vld [vmem:[%s640 + $0x38] sm:$0xff]
    %s649 = scalar_lea.vmem [#allocation7], 6
    %v650 = vld [vmem:[%s649] sm:$0x1]
    %v652 = vsel %vm64, %v639, 0
    %654 = vmatprep.subr.mxu0 0.0
    %655 = vmatpush1.msra.mxu0 %v641
    %656 = vmatprep.subr.mxu0 0.0
    %657 = vmatpush1.msra.mxu0 %v642
    %658 = vmatprep.subr.mxu0 0.0
    %659 = vmatpush1.msra.mxu0 %v643
    %660 = vmatprep.subr.mxu0 0.0
    %661 = vmatpush1.msra.mxu0 %v644
    %662 = vmatprep.subr.mxu0 0.0
    %663 = vmatpush1.msra.mxu0 %v645
    %664 = vmatprep.subr.mxu0 0.0
    %665 = vmatpush1.msra.mxu0 %v646
    %666 = vmatprep.subr.mxu0 0.0
    %667 = vmatpush1.msra.mxu0 %v647
    %668 = vmatprep.subr.mxu0 0.0
    %669 = vmatpush1.msra.mxu0 %v648
    %670 = vmatprep.subr.mxu0 0.0
    %671 = vmatpush1.msra.mxu0 0.0
    %672 = vmatprep.subr.mxu0 0.0
    %673 = vmatpush1.msra.mxu0 0.0
    %674 = vmatprep.subr.mxu0 0.0
    %675 = vmatpush1.msra.mxu0 0.0
    %676 = vmatprep.subr.mxu0 0.0
    %677 = vmatpush1.msra.mxu0 0.0
    %678 = vmatprep.subr.mxu0 0.0
    %679 = vmatpush1.msra.mxu0 0.0
    %680 = vmatprep.subr.mxu0 0.0
    %681 = vmatpush1.msra.mxu0 0.0
    %682 = vmatprep.subr.mxu0 0.0
    %683 = vmatpush1.msra.mxu0 0.0
    %684 = vmatprep.subr.mxu0 0.0
    %685 = vmatpush1.msra.mxu0 0.0
    %686 = vmatprep.subr.mxu0 0.0
    %687 = vmatpush1.msra.mxu0 0.0
    %688 = vmatprep.subr.mxu0 0.0
    %689 = vmatpush1.msra.mxu0 0.0
    %690 = vmatprep.subr.mxu0 0.0
    %691 = vmatpush1.msra.mxu0 0.0
    %692 = vmatprep.subr.mxu0 0.0
    %693 = vmatpush1.msra.mxu0 0.0
    %694 = vmatprep.subr.mxu0 0.0
    %695 = vmatpush1.msra.mxu0 0.0
    %696 = vmatprep.subr.mxu0 0.0
    %697 = vmatpush1.msra.mxu0 0.0
    %698 = vmatprep.subr.mxu0 0.0
    %699 = vmatpush1.msra.mxu0 0.0
    %700 = vmatprep.subr.mxu0 0.0
    %701 = vmatpush1.msra.mxu0 0.0
    %702 = vmatprep.subr.mxu0 0.0
    %703 = vmatpush1.msra.mxu0 0.0
    %704 = vmatprep.subr.mxu0 0.0
    %705 = vmatpush1.msra.mxu0 0.0
    %706 = vmatprep.subr.mxu0 0.0
    %707 = vmatpush1.msra.mxu0 0.0
    %708 = vmatprep.subr.mxu0 0.0
    %709 = vmatpush1.msra.mxu0 0.0
    %710 = vmatprep.subr.mxu0 0.0
    %711 = vmatpush1.msra.mxu0 0.0
    %712 = vmatprep.subr.mxu0 0.0
    %713 = vmatpush1.msra.mxu0 0.0
    %714 = vmatprep.subr.mxu0 0.0
    %715 = vmatpush1.msra.mxu0 0.0
    %716 = vmatprep.subr.mxu0 0.0
    %717 = vmatpush1.msra.mxu0 0.0
    %718 = vmatprep.mubr.f32.mxu0 0.0
    %719 = vmatmul.mubr.f32.gmra.mrb[0].mxu0 %v652
    %v720 = vpop.f32.mrb[0].mxu0
    %v721 = vadd.f32 %v650, %v720
    %v722 = vpop.f32.mrb[0].mxu0
    %723 = vdwg.mxu0
    %v724 = vmax.f32 %v639, 0.0
    %vm725 = vcmp.ne.f32.partialorder %v639, %v639
    %v726 = vadd.f32 %v639, 0.0
    %v727 = vand.u32 2147483647, %v639
    %v728 = vsub.f32 0.0, %v727
    %v729 = vmul.f32 %v728, 1.442695
    %v730 = vpow.pop %v729
    %v731 = vadd.f32 %v730, 1.0
    %v732 = vlog2.pop %v731
    %v733 = vmul.f32 %v732, 0.6931472
    %v734 = vmul.f32 -0.5, %v730
    %v735 = vadd.f32 %v734, 1.0
    %v736 = vmul.f32 %v735, %v730
    %v737 = vand.u32 2147483647, %v730
    %vm738 = vcmp.lt.f32.partialorder %v737, 0.0004427343
    %v739 = vsel %vm738, %v736, %v733
    %v740 = vadd.f32 %v724, %v739
    %v741 = vsel %vm725, %v726, %v740
    %v742 = vtanh.pop %v741
    %v743 = vmul.f32 %v639, %v742
    %s744 = scalar_lea.vmem [#allocation5], 448
    %v745 = vld [vmem:[%s744] sm:$0xff]
    %v746 = vld [vmem:[%s744 + $0x8] sm:$0xff]
    %v747 = vld [vmem:[%s744 + $0x10] sm:$0xff]
    %v748 = vld [vmem:[%s744 + $0x18] sm:$0xff]
    %v749 = vld [vmem:[%s744 + $0x20] sm:$0xff]
    %v750 = vld [vmem:[%s744 + $0x28] sm:$0xff]
    %v751 = vld [vmem:[%s744 + $0x30] sm:$0xff]
    %v752 = vld [vmem:[%s744 + $0x38] sm:$0xff]
    %s753 = scalar_lea.vmem [#allocation7], 7
    %v754 = vld [vmem:[%s753] sm:$0x1]
    %v756 = vsel %vm64, %v743, 0
    %758 = vmatprep.subr.mxu0 0.0
    %759 = vmatpush1.msra.mxu0 %v745
    %760 = vmatprep.subr.mxu0 0.0
    %761 = vmatpush1.msra.mxu0 %v746
    %762 = vmatprep.subr.mxu0 0.0
    %763 = vmatpush1.msra.mxu0 %v747
    %764 = vmatprep.subr.mxu0 0.0
    %765 = vmatpush1.msra.mxu0 %v748
    %766 = vmatprep.subr.mxu0 0.0
    %767 = vmatpush1.msra.mxu0 %v749
    %768 = vmatprep.subr.mxu0 0.0
    %769 = vmatpush1.msra.mxu0 %v750
    %770 = vmatprep.subr.mxu0 0.0
    %771 = vmatpush1.msra.mxu0 %v751
    %772 = vmatprep.subr.mxu0 0.0
    %773 = vmatpush1.msra.mxu0 %v752
    %774 = vmatprep.subr.mxu0 0.0
    %775 = vmatpush1.msra.mxu0 0.0
    %776 = vmatprep.subr.mxu0 0.0
    %777 = vmatpush1.msra.mxu0 0.0
    %778 = vmatprep.subr.mxu0 0.0
    %779 = vmatpush1.msra.mxu0 0.0
    %780 = vmatprep.subr.mxu0 0.0
    %781 = vmatpush1.msra.mxu0 0.0
    %782 = vmatprep.subr.mxu0 0.0
    %783 = vmatpush1.msra.mxu0 0.0
    %784 = vmatprep.subr.mxu0 0.0
    %785 = vmatpush1.msra.mxu0 0.0
    %786 = vmatprep.subr.mxu0 0.0
    %787 = vmatpush1.msra.mxu0 0.0
    %788 = vmatprep.subr.mxu0 0.0
    %789 = vmatpush1.msra.mxu0 0.0
    %790 = vmatprep.subr.mxu0 0.0
    %791 = vmatpush1.msra.mxu0 0.0
    %792 = vmatprep.subr.mxu0 0.0
    %793 = vmatpush1.msra.mxu0 0.0
    %794 = vmatprep.subr.mxu0 0.0
    %795 = vmatpush1.msra.mxu0 0.0
    %796 = vmatprep.subr.mxu0 0.0
    %797 = vmatpush1.msra.mxu0 0.0
    %798 = vmatprep.subr.mxu0 0.0
    %799 = vmatpush1.msra.mxu0 0.0
    %800 = vmatprep.subr.mxu0 0.0
    %801 = vmatpush1.msra.mxu0 0.0
    %802 = vmatprep.subr.mxu0 0.0
    %803 = vmatpush1.msra.mxu0 0.0
    %804 = vmatprep.subr.mxu0 0.0
    %805 = vmatpush1.msra.mxu0 0.0
    %806 = vmatprep.subr.mxu0 0.0
    %807 = vmatpush1.msra.mxu0 0.0
    %808 = vmatprep.subr.mxu0 0.0
    %809 = vmatpush1.msra.mxu0 0.0
    %810 = vmatprep.subr.mxu0 0.0
    %811 = vmatpush1.msra.mxu0 0.0
    %812 = vmatprep.subr.mxu0 0.0
    %813 = vmatpush1.msra.mxu0 0.0
    %814 = vmatprep.subr.mxu0 0.0
    %815 = vmatpush1.msra.mxu0 0.0
    %816 = vmatprep.subr.mxu0 0.0
    %817 = vmatpush1.msra.mxu0 0.0
    %818 = vmatprep.subr.mxu0 0.0
    %819 = vmatpush1.msra.mxu0 0.0
    %820 = vmatprep.subr.mxu0 0.0
    %821 = vmatpush1.msra.mxu0 0.0
    %822 = vmatprep.mubr.f32.mxu0 0.0
    %823 = vmatmul.mubr.f32.gmra.mrb[0].mxu0 %v756
    %v824 = vpop.f32.mrb[0].mxu0
    %v825 = vadd.f32 %v754, %v824
    %v826 = vpop.f32.mrb[0].mxu0
    %827 = vdwg.mxu0
    %v828 = vmax.f32 %v825, 0.0
    %vm829 = vcmp.ne.f32.partialorder %v825, %v825
    %v830 = vadd.f32 %v825, 0.0
    %v831 = vand.u32 2147483647, %v825
    %v832 = vsub.f32 0.0, %v831
    %v833 = vmul.f32 %v832, 1.442695
    %v834 = vpow.pop %v833
    %v835 = vadd.f32 %v834, 1.0
    %v836 = vlog2.pop %v835
    %v837 = vmul.f32 %v836, 0.6931472
    %v838 = vmul.f32 -0.5, %v834
    %v839 = vadd.f32 %v838, 1.0
    %v840 = vmul.f32 %v839, %v834
    %v841 = vand.u32 2147483647, %v834
    %vm842 = vcmp.lt.f32.partialorder %v841, 0.0004427343
    %v843 = vsel %vm842, %v840, %v837
    %v844 = vadd.f32 %v828, %v843
    %v845 = vsel %vm829, %v830, %v844
    %v846 = vtanh.pop %v845
    %v847 = vmul.f32 %v825, %v846
    %s848 = scalar_lea.vmem [#allocation5], 512
    %v849 = vld [vmem:[%s848] sm:$0xff]
    %v850 = vld [vmem:[%s848 + $0x8] sm:$0xff]
    %v851 = vld [vmem:[%s848 + $0x10] sm:$0xff]
    %v852 = vld [vmem:[%s848 + $0x18] sm:$0xff]
    %v853 = vld [vmem:[%s848 + $0x20] sm:$0xff]
    %v854 = vld [vmem:[%s848 + $0x28] sm:$0xff]
    %v855 = vld [vmem:[%s848 + $0x30] sm:$0xff]
    %v856 = vld [vmem:[%s848 + $0x38] sm:$0xff]
    %s857 = scalar_lea.vmem [#allocation7], 8
    %v858 = vld [vmem:[%s857] sm:$0x1]
    %v860 = vsel %vm64, %v847, 0
    %862 = vmatprep.subr.mxu0 0.0
    %863 = vmatpush1.msra.mxu0 %v849
    %864 = vmatprep.subr.mxu0 0.0
    %865 = vmatpush1.msra.mxu0 %v850
    %866 = vmatprep.subr.mxu0 0.0
    %867 = vmatpush1.msra.mxu0 %v851
    %868 = vmatprep.subr.mxu0 0.0
    %869 = vmatpush1.msra.mxu0 %v852
    %870 = vmatprep.subr.mxu0 0.0
    %871 = vmatpush1.msra.mxu0 %v853
    %872 = vmatprep.subr.mxu0 0.0
    %873 = vmatpush1.msra.mxu0 %v854
    %874 = vmatprep.subr.mxu0 0.0
    %875 = vmatpush1.msra.mxu0 %v855
    %876 = vmatprep.subr.mxu0 0.0
    %877 = vmatpush1.msra.mxu0 %v856
    %878 = vmatprep.subr.mxu0 0.0
    %879 = vmatpush1.msra.mxu0 0.0
    %880 = vmatprep.subr.mxu0 0.0
    %881 = vmatpush1.msra.mxu0 0.0
    %882 = vmatprep.subr.mxu0 0.0
    %883 = vmatpush1.msra.mxu0 0.0
    %884 = vmatprep.subr.mxu0 0.0
    %885 = vmatpush1.msra.mxu0 0.0
    %886 = vmatprep.subr.mxu0 0.0
    %887 = vmatpush1.msra.mxu0 0.0
    %888 = vmatprep.subr.mxu0 0.0
    %889 = vmatpush1.msra.mxu0 0.0
    %890 = vmatprep.subr.mxu0 0.0
    %891 = vmatpush1.msra.mxu0 0.0
    %892 = vmatprep.subr.mxu0 0.0
    %893 = vmatpush1.msra.mxu0 0.0
    %894 = vmatprep.subr.mxu0 0.0
    %895 = vmatpush1.msra.mxu0 0.0
    %896 = vmatprep.subr.mxu0 0.0
    %897 = vmatpush1.msra.mxu0 0.0
    %898 = vmatprep.subr.mxu0 0.0
    %899 = vmatpush1.msra.mxu0 0.0
    %900 = vmatprep.subr.mxu0 0.0
    %901 = vmatpush1.msra.mxu0 0.0
    %902 = vmatprep.subr.mxu0 0.0
    %903 = vmatpush1.msra.mxu0 0.0
    %904 = vmatprep.subr.mxu0 0.0
    %905 = vmatpush1.msra.mxu0 0.0
    %906 = vmatprep.subr.mxu0 0.0
    %907 = vmatpush1.msra.mxu0 0.0
    %908 = vmatprep.subr.mxu0 0.0
    %909 = vmatpush1.msra.mxu0 0.0
    %910 = vmatprep.subr.mxu0 0.0
    %911 = vmatpush1.msra.mxu0 0.0
    %912 = vmatprep.subr.mxu0 0.0
    %913 = vmatpush1.msra.mxu0 0.0
    %914 = vmatprep.subr.mxu0 0.0
    %915 = vmatpush1.msra.mxu0 0.0
    %916 = vmatprep.subr.mxu0 0.0
    %917 = vmatpush1.msra.mxu0 0.0
    %918 = vmatprep.subr.mxu0 0.0
    %919 = vmatpush1.msra.mxu0 0.0
    %920 = vmatprep.subr.mxu0 0.0
    %921 = vmatpush1.msra.mxu0 0.0
    %922 = vmatprep.subr.mxu0 0.0
    %923 = vmatpush1.msra.mxu0 0.0
    %924 = vmatprep.subr.mxu0 0.0
    %925 = vmatpush1.msra.mxu0 0.0
    %926 = vmatprep.mubr.f32.mxu0 0.0
    %927 = vmatmul.mubr.f32.gmra.mrb[0].mxu0 %v860
    %v928 = vpop.f32.mrb[0].mxu0
    %v929 = vadd.f32 %v858, %v928
    %v930 = vpop.f32.mrb[0].mxu0
    %931 = vdwg.mxu0
    %v932 = vadd.f32 %v721, %v929
    %s933 = scalar_lea.vmem [#allocation5], 576
    %v934 = vld [vmem:[%s933] sm:$0xff]
    %v935 = vld [vmem:[%s933 + $0x8] sm:$0xff]
    %v936 = vld [vmem:[%s933 + $0x10] sm:$0xff]
    %v937 = vld [vmem:[%s933 + $0x18] sm:$0xff]
    %v938 = vld [vmem:[%s933 + $0x20] sm:$0xff]
    %v939 = vld [vmem:[%s933 + $0x28] sm:$0xff]
    %v940 = vld [vmem:[%s933 + $0x30] sm:$0xff]
    %v941 = vld [vmem:[%s933 + $0x38] sm:$0xff]
    %s942 = scalar_lea.vmem [#allocation7], 9
    %v943 = vld [vmem:[%s942] sm:$0x1]
    %v945 = vsel %vm64, %v932, 0
    %947 = vmatprep.subr.mxu0 0.0
    %948 = vmatpush1.msra.mxu0 %v934
    %949 = vmatprep.subr.mxu0 0.0
    %950 = vmatpush1.msra.mxu0 %v935
    %951 = vmatprep.subr.mxu0 0.0
    %952 = vmatpush1.msra.mxu0 %v936
    %953 = vmatprep.subr.mxu0 0.0
    %954 = vmatpush1.msra.mxu0 %v937
    %955 = vmatprep.subr.mxu0 0.0
    %956 = vmatpush1.msra.mxu0 %v938
    %957 = vmatprep.subr.mxu0 0.0
    %958 = vmatpush1.msra.mxu0 %v939
    %959 = vmatprep.subr.mxu0 0.0
    %960 = vmatpush1.msra.mxu0 %v940
    %961 = vmatprep.subr.mxu0 0.0
    %962 = vmatpush1.msra.mxu0 %v941
    %963 = vmatprep.subr.mxu0 0.0
    %964 = vmatpush1.msra.mxu0 0.0
    %965 = vmatprep.subr.mxu0 0.0
    %966 = vmatpush1.msra.mxu0 0.0
    %967 = vmatprep.subr.mxu0 0.0
    %968 = vmatpush1.msra.mxu0 0.0
    %969 = vmatprep.subr.mxu0 0.0
    %970 = vmatpush1.msra.mxu0 0.0
    %971 = vmatprep.subr.mxu0 0.0
    %972 = vmatpush1.msra.mxu0 0.0
    %973 = vmatprep.subr.mxu0 0.0
    %974 = vmatpush1.msra.mxu0 0.0
    %975 = vmatprep.subr.mxu0 0.0
    %976 = vmatpush1.msra.mxu0 0.0
    %977 = vmatprep.subr.mxu0 0.0
    %978 = vmatpush1.msra.mxu0 0.0
    %979 = vmatprep.subr.mxu0 0.0
    %980 = vmatpush1.msra.mxu0 0.0
    %981 = vmatprep.subr.mxu0 0.0
    %982 = vmatpush1.msra.mxu0 0.0
    %983 = vmatprep.subr.mxu0 0.0
    %984 = vmatpush1.msra.mxu0 0.0
    %985 = vmatprep.subr.mxu0 0.0
    %986 = vmatpush1.msra.mxu0 0.0
    %987 = vmatprep.subr.mxu0 0.0
    %988 = vmatpush1.msra.mxu0 0.0
    %989 = vmatprep.subr.mxu0 0.0
    %990 = vmatpush1.msra.mxu0 0.0
    %991 = vmatprep.subr.mxu0 0.0
    %992 = vmatpush1.msra.mxu0 0.0
    %993 = vmatprep.subr.mxu0 0.0
    %994 = vmatpush1.msra.mxu0 0.0
    %995 = vmatprep.subr.mxu0 0.0
    %996 = vmatpush1.msra.mxu0 0.0
    %997 = vmatprep.subr.mxu0 0.0
    %998 = vmatpush1.msra.mxu0 0.0
    %999 = vmatprep.subr.mxu0 0.0
    %1000 = vmatpush1.msra.mxu0 0.0
    %1001 = vmatprep.subr.mxu0 0.0
    %1002 = vmatpush1.msra.mxu0 0.0
    %1003 = vmatprep.subr.mxu0 0.0
    %1004 = vmatpush1.msra.mxu0 0.0
    %1005 = vmatprep.subr.mxu0 0.0
    %1006 = vmatpush1.msra.mxu0 0.0
    %1007 = vmatprep.subr.mxu0 0.0
    %1008 = vmatpush1.msra.mxu0 0.0
    %1009 = vmatprep.subr.mxu0 0.0
    %1010 = vmatpush1.msra.mxu0 0.0
    %1011 = vmatprep.mubr.f32.mxu0 0.0
    %1012 = vmatmul.mubr.f32.gmra.mrb[0].mxu0 %v945
    %v1013 = vpop.f32.mrb[0].mxu0
    %v1014 = vadd.f32 %v943, %v1013
    %v1015 = vpop.f32.mrb[0].mxu0
    %1016 = vdwg.mxu0
    %v1017 = vmax.f32 %v932, 0.0
    %vm1018 = vcmp.ne.f32.partialorder %v932, %v932
    %v1019 = vadd.f32 %v932, 0.0
    %v1020 = vand.u32 2147483647, %v932
    %v1021 = vsub.f32 0.0, %v1020
    %v1022 = vmul.f32 %v1021, 1.442695
    %v1023 = vpow.pop %v1022
    %v1024 = vadd.f32 %v1023, 1.0
    %v1025 = vlog2.pop %v1024
    %v1026 = vmul.f32 %v1025, 0.6931472
    %v1027 = vmul.f32 -0.5, %v1023
    %v1028 = vadd.f32 %v1027, 1.0
    %v1029 = vmul.f32 %v1028, %v1023
    %v1030 = vand.u32 2147483647, %v1023
    %vm1031 = vcmp.lt.f32.partialorder %v1030, 0.0004427343
    %v1032 = vsel %vm1031, %v1029, %v1026
    %v1033 = vadd.f32 %v1017, %v1032
    %v1034 = vsel %vm1018, %v1019, %v1033
    %v1035 = vtanh.pop %v1034
    %v1036 = vmul.f32 %v932, %v1035
    %s1037 = scalar_lea.vmem [#allocation5], 640
    %v1038 = vld [vmem:[%s1037] sm:$0xff]
    %v1039 = vld [vmem:[%s1037 + $0x8] sm:$0xff]
    %v1040 = vld [vmem:[%s1037 + $0x10] sm:$0xff]
    %v1041 = vld [vmem:[%s1037 + $0x18] sm:$0xff]
    %v1042 = vld [vmem:[%s1037 + $0x20] sm:$0xff]
    %v1043 = vld [vmem:[%s1037 + $0x28] sm:$0xff]
    %v1044 = vld [vmem:[%s1037 + $0x30] sm:$0xff]
    %v1045 = vld [vmem:[%s1037 + $0x38] sm:$0xff]
    %s1046 = scalar_lea.vmem [#allocation7], 10
    %v1047 = vld [vmem:[%s1046] sm:$0x1]
    %v1049 = vsel %vm64, %v1036, 0
    %1051 = vmatprep.subr.mxu0 0.0
    %1052 = vmatpush1.msra.mxu0 %v1038
    %1053 = vmatprep.subr.mxu0 0.0
    %1054 = vmatpush1.msra.mxu0 %v1039
    %1055 = vmatprep.subr.mxu0 0.0
    %1056 = vmatpush1.msra.mxu0 %v1040
    %1057 = vmatprep.subr.mxu0 0.0
    %1058 = vmatpush1.msra.mxu0 %v1041
    %1059 = vmatprep.subr.mxu0 0.0
    %1060 = vmatpush1.msra.mxu0 %v1042
    %1061 = vmatprep.subr.mxu0 0.0
    %1062 = vmatpush1.msra.mxu0 %v1043
    %1063 = vmatprep.subr.mxu0 0.0
    %1064 = vmatpush1.msra.mxu0 %v1044
    %1065 = vmatprep.subr.mxu0 0.0
    %1066 = vmatpush1.msra.mxu0 %v1045
    %1067 = vmatprep.subr.mxu0 0.0
    %1068 = vmatpush1.msra.mxu0 0.0
    %1069 = vmatprep.subr.mxu0 0.0
    %1070 = vmatpush1.msra.mxu0 0.0
    %1071 = vmatprep.subr.mxu0 0.0
    %1072 = vmatpush1.msra.mxu0 0.0
    %1073 = vmatprep.subr.mxu0 0.0
    %1074 = vmatpush1.msra.mxu0 0.0
    %1075 = vmatprep.subr.mxu0 0.0
    %1076 = vmatpush1.msra.mxu0 0.0
    %1077 = vmatprep.subr.mxu0 0.0
    %1078 = vmatpush1.msra.mxu0 0.0
    %1079 = vmatprep.subr.mxu0 0.0
    %1080 = vmatpush1.msra.mxu0 0.0
    %1081 = vmatprep.subr.mxu0 0.0
    %1082 = vmatpush1.msra.mxu0 0.0
    %1083 = vmatprep.subr.mxu0 0.0
    %1084 = vmatpush1.msra.mxu0 0.0
    %1085 = vmatprep.subr.mxu0 0.0
    %1086 = vmatpush1.msra.mxu0 0.0
    %1087 = vmatprep.subr.mxu0 0.0
    %1088 = vmatpush1.msra.mxu0 0.0
    %1089 = vmatprep.subr.mxu0 0.0
    %1090 = vmatpush1.msra.mxu0 0.0
    %1091 = vmatprep.subr.mxu0 0.0
    %1092 = vmatpush1.msra.mxu0 0.0
    %1093 = vmatprep.subr.mxu0 0.0
    %1094 = vmatpush1.msra.mxu0 0.0
    %1095 = vmatprep.subr.mxu0 0.0
    %1096 = vmatpush1.msra.mxu0 0.0
    %1097 = vmatprep.subr.mxu0 0.0
    %1098 = vmatpush1.msra.mxu0 0.0
    %1099 = vmatprep.subr.mxu0 0.0
    %1100 = vmatpush1.msra.mxu0 0.0
    %1101 = vmatprep.subr.mxu0 0.0
    %1102 = vmatpush1.msra.mxu0 0.0
    %1103 = vmatprep.subr.mxu0 0.0
    %1104 = vmatpush1.msra.mxu0 0.0
    %1105 = vmatprep.subr.mxu0 0.0
    %1106 = vmatpush1.msra.mxu0 0.0
    %1107 = vmatprep.subr.mxu0 0.0
    %1108 = vmatpush1.msra.mxu0 0.0
    %1109 = vmatprep.subr.mxu0 0.0
    %1110 = vmatpush1.msra.mxu0 0.0
    %1111 = vmatprep.subr.mxu0 0.0
    %1112 = vmatpush1.msra.mxu0 0.0
    %1113 = vmatprep.subr.mxu0 0.0
    %1114 = vmatpush1.msra.mxu0 0.0
    %1115 = vmatprep.mubr.f32.mxu0 0.0
    %1116 = vmatmul.mubr.f32.gmra.mrb[0].mxu0 %v1049
    %v1117 = vpop.f32.mrb[0].mxu0
    %v1118 = vadd.f32 %v1047, %v1117
    %v1119 = vpop.f32.mrb[0].mxu0
    %1120 = vdwg.mxu0
    %v1121 = vmax.f32 %v1118, 0.0
    %vm1122 = vcmp.ne.f32.partialorder %v1118, %v1118
    %v1123 = vadd.f32 %v1118, 0.0
    %v1124 = vand.u32 2147483647, %v1118
    %v1125 = vsub.f32 0.0, %v1124
    %v1126 = vmul.f32 %v1125, 1.442695
    %v1127 = vpow.pop %v1126
    %v1128 = vadd.f32 %v1127, 1.0
    %v1129 = vlog2.pop %v1128
    %v1130 = vmul.f32 %v1129, 0.6931472
    %v1131 = vmul.f32 -0.5, %v1127
    %v1132 = vadd.f32 %v1131, 1.0
    %v1133 = vmul.f32 %v1132, %v1127
    %v1134 = vand.u32 2147483647, %v1127
    %vm1135 = vcmp.lt.f32.partialorder %v1134, 0.0004427343
    %v1136 = vsel %vm1135, %v1133, %v1130
    %v1137 = vadd.f32 %v1121, %v1136
    %v1138 = vsel %vm1122, %v1123, %v1137
    %v1139 = vtanh.pop %v1138
    %v1140 = vmul.f32 %v1118, %v1139
    %s1141 = scalar_lea.vmem [#allocation5], 704
    %v1142 = vld [vmem:[%s1141] sm:$0xff]
    %v1143 = vld [vmem:[%s1141 + $0x8] sm:$0xff]
    %v1144 = vld [vmem:[%s1141 + $0x10] sm:$0xff]
    %v1145 = vld [vmem:[%s1141 + $0x18] sm:$0xff]
    %v1146 = vld [vmem:[%s1141 + $0x20] sm:$0xff]
    %v1147 = vld [vmem:[%s1141 + $0x28] sm:$0xff]
    %v1148 = vld [vmem:[%s1141 + $0x30] sm:$0xff]
    %v1149 = vld [vmem:[%s1141 + $0x38] sm:$0xff]
    %s1150 = scalar_lea.vmem [#allocation7], 11
    %v1151 = vld [vmem:[%s1150] sm:$0x1]
    %v1153 = vsel %vm64, %v1140, 0
    %1155 = vmatprep.subr.mxu0 0.0
    %1156 = vmatpush1.msra.mxu0 %v1142
    %1157 = vmatprep.subr.mxu0 0.0
    %1158 = vmatpush1.msra.mxu0 %v1143
    %1159 = vmatprep.subr.mxu0 0.0
    %1160 = vmatpush1.msra.mxu0 %v1144
    %1161 = vmatprep.subr.mxu0 0.0
    %1162 = vmatpush1.msra.mxu0 %v1145
    %1163 = vmatprep.subr.mxu0 0.0
    %1164 = vmatpush1.msra.mxu0 %v1146
    %1165 = vmatprep.subr.mxu0 0.0
    %1166 = vmatpush1.msra.mxu0 %v1147
    %1167 = vmatprep.subr.mxu0 0.0
    %1168 = vmatpush1.msra.mxu0 %v1148
    %1169 = vmatprep.subr.mxu0 0.0
    %1170 = vmatpush1.msra.mxu0 %v1149
    %1171 = vmatprep.subr.mxu0 0.0
    %1172 = vmatpush1.msra.mxu0 0.0
    %1173 = vmatprep.subr.mxu0 0.0
    %1174 = vmatpush1.msra.mxu0 0.0
    %1175 = vmatprep.subr.mxu0 0.0
    %1176 = vmatpush1.msra.mxu0 0.0
    %1177 = vmatprep.subr.mxu0 0.0
    %1178 = vmatpush1.msra.mxu0 0.0
    %1179 = vmatprep.subr.mxu0 0.0
    %1180 = vmatpush1.msra.mxu0 0.0
    %1181 = vmatprep.subr.mxu0 0.0
    %1182 = vmatpush1.msra.mxu0 0.0
    %1183 = vmatprep.subr.mxu0 0.0
    %1184 = vmatpush1.msra.mxu0 0.0
    %1185 = vmatprep.subr.mxu0 0.0
    %1186 = vmatpush1.msra.mxu0 0.0
    %1187 = vmatprep.subr.mxu0 0.0
    %1188 = vmatpush1.msra.mxu0 0.0
    %1189 = vmatprep.subr.mxu0 0.0
    %1190 = vmatpush1.msra.mxu0 0.0
    %1191 = vmatprep.subr.mxu0 0.0
    %1192 = vmatpush1.msra.mxu0 0.0
    %1193 = vmatprep.subr.mxu0 0.0
    %1194 = vmatpush1.msra.mxu0 0.0
    %1195 = vmatprep.subr.mxu0 0.0
    %1196 = vmatpush1.msra.mxu0 0.0
    %1197 = vmatprep.subr.mxu0 0.0
    %1198 = vmatpush1.msra.mxu0 0.0
    %1199 = vmatprep.subr.mxu0 0.0
    %1200 = vmatpush1.msra.mxu0 0.0
    %1201 = vmatprep.subr.mxu0 0.0
    %1202 = vmatpush1.msra.mxu0 0.0
    %1203 = vmatprep.subr.mxu0 0.0
    %1204 = vmatpush1.msra.mxu0 0.0
    %1205 = vmatprep.subr.mxu0 0.0
    %1206 = vmatpush1.msra.mxu0 0.0
    %1207 = vmatprep.subr.mxu0 0.0
    %1208 = vmatpush1.msra.mxu0 0.0
    %1209 = vmatprep.subr.mxu0 0.0
    %1210 = vmatpush1.msra.mxu0 0.0
    %1211 = vmatprep.subr.mxu0 0.0
    %1212 = vmatpush1.msra.mxu0 0.0
    %1213 = vmatprep.subr.mxu0 0.0
    %1214 = vmatpush1.msra.mxu0 0.0
    %1215 = vmatprep.subr.mxu0 0.0
    %1216 = vmatpush1.msra.mxu0 0.0
    %1217 = vmatprep.subr.mxu0 0.0
    %1218 = vmatpush1.msra.mxu0 0.0
    %1219 = vmatprep.mubr.f32.mxu0 0.0
    %1220 = vmatmul.mubr.f32.gmra.mrb[0].mxu0 %v1153
    %v1221 = vpop.f32.mrb[0].mxu0
    %v1222 = vadd.f32 %v1151, %v1221
    %v1223 = vpop.f32.mrb[0].mxu0
    %1224 = vdwg.mxu0
    %v1225 = vadd.f32 %v1014, %v1222
    %s1226 = scalar_lea.vmem [#allocation5], 768
    %v1227 = vld [vmem:[%s1226] sm:$0xff]
    %v1228 = vld [vmem:[%s1226 + $0x8] sm:$0xff]
    %v1229 = vld [vmem:[%s1226 + $0x10] sm:$0xff]
    %v1230 = vld [vmem:[%s1226 + $0x18] sm:$0xff]
    %v1231 = vld [vmem:[%s1226 + $0x20] sm:$0xff]
    %v1232 = vld [vmem:[%s1226 + $0x28] sm:$0xff]
    %v1233 = vld [vmem:[%s1226 + $0x30] sm:$0xff]
    %v1234 = vld [vmem:[%s1226 + $0x38] sm:$0xff]
    %s1235 = scalar_lea.vmem [#allocation7], 12
    %v1236 = vld [vmem:[%s1235] sm:$0x1]
    %v1238 = vsel %vm64, %v1225, 0
    %1240 = vmatprep.subr.mxu0 0.0
    %1241 = vmatpush1.msra.mxu0 %v1227
    %1242 = vmatprep.subr.mxu0 0.0
    %1243 = vmatpush1.msra.mxu0 %v1228
    %1244 = vmatprep.subr.mxu0 0.0
    %1245 = vmatpush1.msra.mxu0 %v1229
    %1246 = vmatprep.subr.mxu0 0.0
    %1247 = vmatpush1.msra.mxu0 %v1230
    %1248 = vmatprep.subr.mxu0 0.0
    %1249 = vmatpush1.msra.mxu0 %v1231
    %1250 = vmatprep.subr.mxu0 0.0
    %1251 = vmatpush1.msra.mxu0 %v1232
    %1252 = vmatprep.subr.mxu0 0.0
    %1253 = vmatpush1.msra.mxu0 %v1233
    %1254 = vmatprep.subr.mxu0 0.0
    %1255 = vmatpush1.msra.mxu0 %v1234
    %1256 = vmatprep.subr.mxu0 0.0
    %1257 = vmatpush1.msra.mxu0 0.0
    %1258 = vmatprep.subr.mxu0 0.0
    %1259 = vmatpush1.msra.mxu0 0.0
    %1260 = vmatprep.subr.mxu0 0.0
    %1261 = vmatpush1.msra.mxu0 0.0
    %1262 = vmatprep.subr.mxu0 0.0
    %1263 = vmatpush1.msra.mxu0 0.0
    %1264 = vmatprep.subr.mxu0 0.0
    %1265 = vmatpush1.msra.mxu0 0.0
    %1266 = vmatprep.subr.mxu0 0.0
    %1267 = vmatpush1.msra.mxu0 0.0
    %1268 = vmatprep.subr.mxu0 0.0
    %1269 = vmatpush1.msra.mxu0 0.0
    %1270 = vmatprep.subr.mxu0 0.0
    %1271 = vmatpush1.msra.mxu0 0.0
    %1272 = vmatprep.subr.mxu0 0.0
    %1273 = vmatpush1.msra.mxu0 0.0
    %1274 = vmatprep.subr.mxu0 0.0
    %1275 = vmatpush1.msra.mxu0 0.0
    %1276 = vmatprep.subr.mxu0 0.0
    %1277 = vmatpush1.msra.mxu0 0.0
    %1278 = vmatprep.subr.mxu0 0.0
    %1279 = vmatpush1.msra.mxu0 0.0
    %1280 = vmatprep.subr.mxu0 0.0
    %1281 = vmatpush1.msra.mxu0 0.0
    %1282 = vmatprep.subr.mxu0 0.0
    %1283 = vmatpush1.msra.mxu0 0.0
    %1284 = vmatprep.subr.mxu0 0.0
    %1285 = vmatpush1.msra.mxu0 0.0
    %1286 = vmatprep.subr.mxu0 0.0
    %1287 = vmatpush1.msra.mxu0 0.0
    %1288 = vmatprep.subr.mxu0 0.0
    %1289 = vmatpush1.msra.mxu0 0.0
    %1290 = vmatprep.subr.mxu0 0.0
    %1291 = vmatpush1.msra.mxu0 0.0
    %1292 = vmatprep.subr.mxu0 0.0
    %1293 = vmatpush1.msra.mxu0 0.0
    %1294 = vmatprep.subr.mxu0 0.0
    %1295 = vmatpush1.msra.mxu0 0.0
    %1296 = vmatprep.subr.mxu0 0.0
    %1297 = vmatpush1.msra.mxu0 0.0
    %1298 = vmatprep.subr.mxu0 0.0
    %1299 = vmatpush1.msra.mxu0 0.0
    %1300 = vmatprep.subr.mxu0 0.0
    %1301 = vmatpush1.msra.mxu0 0.0
    %1302 = vmatprep.subr.mxu0 0.0
    %1303 = vmatpush1.msra.mxu0 0.0
    %1304 = vmatprep.mubr.f32.mxu0 0.0
    %1305 = vmatmul.mubr.f32.gmra.mrb[0].mxu0 %v1238
    %v1306 = vpop.f32.mrb[0].mxu0
    %v1307 = vadd.f32 %v1236, %v1306
    %v1308 = vpop.f32.mrb[0].mxu0
    %1309 = vdwg.mxu0
    %v1310 = vand.u32 2147483647, %v1307
    %v1311 = vsub.f32 0.0, %v1310
    %v1312 = vmul.f32 %v1311, 1.442695
    %v1313 = vpow.pop %v1312
    %v1314 = vadd.f32 %v1313, 1.0
    %v1315 = vrcp.pop %v1314
    %vm1316 = vcmp.ge.f32.partialorder %v1307, 0.0
    %v1317 = vsub.f32 1.0, %v1315
    %v1318 = vsel %vm1316, %v1315, %v1317
    %vm1319 = vcmask 516096
    %1320 = vst.msk [vmem:[#allocation8] sm:$0x1] %vm1319, %v1318
    // Predicated region
    $region26: #{tpu_custom_call.1} parent=1 // pred_check
      _
    $region27: #{tpu_custom_call.1} parent=1 // pred_check_branch
      %1322 = sbr.rel (0) target = $region29
    $region28: #{tpu_custom_call.1} parent=1 // pred_region
      %s1324 = ssub.s32 16, 16
      %1325 = vsyncadd [#allocation4], %s1324
      %s1327 = sshll.u32 [#allocation8], 4
      %s1328 = int_to_ptr.vmem [resolvable:$true] %s1327
      %1330 = dma.vmem_to_hbm [thread:$0]  %s1328, 16, %s3, [#allocation4]
    $region29: #{tpu_custom_call.1} parent=1 // pred_fallthru
      _
    // Predicated region
    $region30: #{tpu_custom_call.1} parent=1 // pred_check
      _
    $region31: #{tpu_custom_call.1} parent=1 // pred_check_branch
      %1332 = sbr.rel (0) target = $region33
    $region32: #{tpu_custom_call.1} parent=1 // pred_region
      %1333 = dma.done [#allocation4], 16
    $region33: #{tpu_custom_call.1} parent=1 // pred_fallthru
      _
    %1334 = vsyncpa [#allocation3], 1
    %1335 = vsyncpa [#allocation6], 1
    %1336 = vsyncpa [#allocation4], 1

</llo_original>
